<compile_context>
chip_gen: v7x
topology: tpu7x:2x2x1
jax: 0.10.0
libtpu: 0.0.40
codegen_flags: <defaults>
</compile_context>

<pallas_src>
import jax
import jax.numpy as jnp
import numpy as np
from jax.experimental import pallas as pl
from jax.experimental import pallas as _pl  # noqa: F401
from jax.experimental.pallas import tpu as pltpu  # noqa: F401  (not needed for this grid-less kernel)

EPS = 1e-6
S = 2  # number of streams (left / right)


# -----------------------------------------------------------------------------
# Host-side parameter re-layout (done once; the kernel sees 2 packed arrays).
# -----------------------------------------------------------------------------
def build_packs(p, N, H, W, C):
    C2 = 2 * C
    LC = S * C * W          # lane width of a c-channel tensor   (128 here)
    L2 = S * C2 * W         # lane width of a 2c-channel tensor  (256 here)
    R = N * H               # rows = batch * height              (32 here)

    f32 = np.float32
    eyeW = np.eye(W, dtype=f32)
    eyeS = np.eye(S, dtype=f32)

    def vec(a):
        return np.asarray(a, f32).reshape(-1)

    def expand(wmat):
        # (Cin, Cout) 1x1-conv weight -> (S*Cin*W, S*Cout*W) matrix acting on the
        # packed lane layout  l = s*Cin*W + c*W + w   (delta on s and w).
        return np.kron(eyeS, np.kron(np.asarray(wmat, f32), eyeW))

    def cvec(v):
        # per-channel vector -> lane vector broadcast over (s, w)
        return np.kron(np.ones(S, f32), np.kron(vec(v), np.ones(W, f32)))

    ln1w, ln1b = vec(p["ln1_w"]), vec(p["ln1_b"])
    ln2w, ln2b = vec(p["ln2_w"]), vec(p["ln2_b"])
    w1, b1 = np.asarray(p["w1"], f32), vec(p["b1"])
    w3, b3 = np.asarray(p["w3"], f32), vec(p["b3"])
    w4, b4 = np.asarray(p["w4"], f32), vec(p["b4"])
    w5, b5 = np.asarray(p["w5"], f32), vec(p["b5"])
    caw, cab_b = np.asarray(p["ca_w"], f32), vec(p["ca_b"])
    dww, dwb = np.asarray(p["dw_w"], f32), vec(p["dw_b"])

    # Fold the LayerNorm affine (gamma/beta) into the 1x1 conv that follows it.
    w1e = expand(ln1w[:, None] * w1)
    b1v = cvec(ln1b @ w1 + b1)
    w4e = expand(ln2w[:, None] * w4)
    b4v = cvec(ln2b @ w4 + b4)
    w3e, b3v = expand(w3), cvec(b3)
    w5e, b5v = expand(w5), cvec(b5)

    # LayerNorm per-pixel channel mean, broadcast back to every channel lane.
    a_mean = expand(np.ones((C, C), f32) / C)

    # CABlock: the (1/W) lane part of the global pool fused with the 1x1 conv on
    # the pooled vector (result broadcast back over w) ...
    a_ca = np.kron(eyeS, np.kron(caw, np.ones((W, W), f32) / W))
    cabv = cvec(cab_b)
    # ... and the (1/H) row part of the pool (mean over h inside each batch elem).
    bp = np.kron(np.eye(N, dtype=f32), np.ones((H, H), f32) / H)

    # Per-stream / per-channel skip scales a_l/a_r and b_l/b_r as lane vectors.
    a_vec = np.concatenate([np.kron(vec(p["a_l"]), np.ones(W, f32)),
                            np.kron(vec(p["a_r"]), np.ones(W, f32))])
    b_vec = np.concatenate([np.kron(vec(p["b_l"]), np.ones(W, f32)),
                            np.kron(vec(p["b_r"]), np.ones(W, f32))])

    # Depthwise 3x3 taps as lane vectors.  The horizontal SAME-padding mask is
    # folded in (tap zeroed wherever w+dx would fall outside the image), and the
    # kx!=1 columns are additionally PRE-SHIFTED along the lane axis, so the
    # kernel applies the tap BEFORE a single horizontal lane-shift per direction
    # (2 shifts instead of 6).
    taps = np.zeros((9, L2), f32)
    for ky in range(3):
        for kx in range(3):
            t = ky * 3 + kx
            dj = kx - 1
            wmask = np.array([1.0 if 0 <= w + dj < W else 0.0 for w in range(W)], f32)
            tap = np.kron(np.ones(S * C2, f32), wmask) * cvec(dww[t])
            if dj == -1:      # tap2[m] = tap[m+1]
                tap = np.concatenate([tap[1:], np.zeros(1, f32)])
            elif dj == 1:     # tap2[m] = tap[m-1]
                tap = np.concatenate([np.zeros(1, f32), tap[:-1]])
            taps[t] = tap
    dwbv = cvec(dwb)

    # Vertical (h-edge) masks for the two row-shifted variants.
    rr = np.arange(R)
    m_hm = np.tile(((rr % H) != 0).astype(f32)[:, None], (1, L2))      # valid h-1
    m_hp = np.tile(((rr % H) != H - 1).astype(f32)[:, None], (1, L2))  # valid h+1

    offs = {}

    # -------- packA : everything LC (=128) lanes wide --------
    offs["amean"], offs["w3"], offs["w5"], offs["aca"] = 0, LC, 2 * LC, 3 * LC
    offs["bp"] = 4 * LC
    offs["vec"] = 4 * LC + R
    ra = -(-(offs["vec"] + 5) // 8) * 8
    packA = np.zeros((ra, LC), f32)
    packA[offs["amean"]:offs["amean"] + LC] = a_mean
    packA[offs["w3"]:offs["w3"] + LC] = w3e
    packA[offs["w5"]:offs["w5"] + LC] = w5e
    packA[offs["aca"]:offs["aca"] + LC] = a_ca
    packA[offs["bp"]:offs["bp"] + R, 0:R] = bp
    v = offs["vec"]
    packA[v + 0], packA[v + 1], packA[v + 2] = b3v, b5v, cabv
    packA[v + 3], packA[v + 4] = a_vec, b_vec

    # -------- packB : everything L2 (=256) lanes wide --------
    offs["w1"], offs["w4"] = 0, LC
    offs["mhm"], offs["mhp"] = 2 * LC, 2 * LC + R
    offs["tap"] = 2 * LC + 2 * R
    offs["dwb"] = offs["tap"] + 9
    offs["b1"] = offs["dwb"] + 1
    offs["b4"] = offs["b1"] + 1
    rb = -(-(offs["b4"] + 1) // 8) * 8
    packB = np.zeros((rb, L2), f32)
    packB[offs["w1"]:offs["w1"] + LC] = w1e
    packB[offs["w4"]:offs["w4"] + LC] = w4e
    packB[offs["mhm"]:offs["mhm"] + R] = m_hm
    packB[offs["mhp"]:offs["mhp"] + R] = m_hp
    packB[offs["tap"]:offs["tap"] + 9] = taps
    packB[offs["dwb"]] = dwbv
    packB[offs["b1"]] = b1v
    packB[offs["b4"]] = b4v

    return jnp.asarray(packA), jnp.asarray(packB), offs


# -----------------------------------------------------------------------------
# Pallas kernel
# -----------------------------------------------------------------------------
def make_kernel(N, H, W, C, offs):
    C2 = 2 * C
    LC, L2, R = S * C * W, S * C2 * W, N * H
    CH = C * W                                  # lanes per (stream, chunk) = 64

    def kernel(zin_ref, pa_ref, pb_ref, zout_ref):
        f32 = jnp.float32
        x0 = zin_ref[...]                        # (R, LC) : both streams + batch

        def layernorm(x):
            # biased per-pixel channel statistics; affine folded into next conv
            a_mean = pa_ref[offs["amean"]:offs["amean"] + LC, :]
            mu = jnp.dot(x, a_mean, preferred_element_type=f32)
            e = x - mu
            var = jnp.dot(e * e, a_mean, preferred_element_type=f32)
            return e * jax.lax.rsqrt(var + EPS)

        def conv_up(x, woff, boff):              # 1x1 conv c -> 2c (one big matmul)
            return (jnp.dot(x, pb_ref[woff:woff + LC, :], preferred_element_type=f32)
                    + pb_ref[boff:boff + 1, :])

        def conv_cc(x, woff, boff):              # 1x1 conv c -> c
            return (jnp.dot(x, pa_ref[woff:woff + LC, :], preferred_element_type=f32)
                    + pa_ref[boff:boff + 1, :])

        def dwconv3x3(z):                        # depthwise 3x3, SAME padding
            m_hm = pb_ref[offs["mhm"]:offs["mhm"] + R, :]
            m_hp = pb_ref[offs["mhp"]:offs["mhp"] + R, :]
            t0 = offs["tap"]
            zero_r = jnp.zeros((1, L2), f32)
            zero_c = jnp.zeros((R, 1), f32)
            # vertical neighbours (value at h-1 / h+1); image-edge rows masked
            rows_m = jnp.concatenate([zero_r, z[:-1, :]], axis=0) * m_hm   # h-1
            rows_p = jnp.concatenate([z[1:, :], zero_r], axis=0) * m_hp    # h+1

            def col(kx):
                # vertical combination for one horizontal tap column (taps for
                # kx=0 / kx=2 were pre-shifted on the host, so the horizontal
                # lane-shift can be applied AFTER the multiply-accumulate)
                return (rows_m * pb_ref[t0 + kx:t0 + kx + 1, :]
                        + z * pb_ref[t0 + 3 + kx:t0 + 3 + kx + 1, :]
                        + rows_p * pb_ref[t0 + 6 + kx:t0 + 6 + kx + 1, :])

            u_l, u_c, u_r = col(0), col(1), col(2)
            acc = (u_c
                   + jnp.concatenate([zero_c, u_l[:, :-1]], axis=1)    # shift w-1
                   + jnp.concatenate([u_r[:, 1:], zero_c], axis=1))    # shift w+1
            return acc + pb_ref[offs["dwb"]:offs["dwb"] + 1, :]

        def gate(z2):
            # DualStreamGate: chunk over channels, cross-multiply the two streams
            g0 = z2[:, 0:CH] * z2[:, 3 * CH:4 * CH]        # x1 * y2  (left out)
            g1 = z2[:, 2 * CH:3 * CH] * z2[:, CH:2 * CH]   # y1 * x2  (right out)
            return jnp.concatenate([g0, g1], axis=1)        # (R, LC)

        def cab(g):
            # CABlock: global avg-pool + 1x1 conv as two batched matmuls, then scale
            pooled = jnp.dot(pa_ref[offs["bp"]:offs["bp"] + R, 0:R], g,
                             preferred_element_type=f32)
            scale = (jnp.dot(pooled, pa_ref[offs["aca"]:offs["aca"] + LC, :],
                             preferred_element_type=f32)
                     + pa_ref[offs["vec"] + 2:offs["vec"] + 3, :])
            return g * scale

        v = offs["vec"]
        # ------------------------------ block1 ------------------------------
        t = layernorm(x0)
        t = conv_up(t, offs["w1"], offs["b1"])
        t = dwconv3x3(t)
        g = gate(t)
        g = cab(g)
        g = conv_cc(g, offs["w3"], v + 0)
        x_skip = x0 + g * pa_ref[v + 3:v + 4, :]            # a_l / a_r

        # ------------------------------ block2 ------------------------------
        t = layernorm(x_skip)
        t = conv_up(t, offs["w4"], offs["b4"])
        g = gate(t)
        g = conv_cc(g, offs["w5"], v + 1)
        zout_ref[...] = (x_skip + g * pa_ref[v + 4:v + 5, :]).astype(zout_ref.dtype)

    return kernel


# -----------------------------------------------------------------------------
# Wrapper factory: build packs + kernel once, return a jitted forward function
# (pack activations lane-dense, run the single-step kernel, unpack).
# -----------------------------------------------------------------------------
def make_mugi_block(params, N, H, W, C):
    LC = S * C * W
    R = N * H
    packA, packB, offs = build_packs(params, N, H, W, C)
    kernel = make_kernel(N, H, W, C, offs)

    call = pl.pallas_call(
        kernel,
        out_shape=jax.ShapeDtypeStruct((R, LC), jnp.float32),
    )

    @jax.jit
    def fwd(inp_l, inp_r):
        # row = n*H + h ; lane = s*C*W + c*W + w  ->  (32, 128) fully lane-dense
        x = jnp.stack([inp_l, inp_r], axis=0).astype(jnp.float32)   # (S,N,H,W,C)
        zin = x.transpose(1, 2, 0, 4, 3).reshape(R, LC)
        zout = call(zin, packA, packB)
        y = zout.reshape(N, H, S, C, W).transpose(2, 0, 1, 4, 3)    # (S,N,H,W,C)
        return y[0].astype(inp_l.dtype), y[1].astype(inp_r.dtype)

    return fwd


def mugi_block(inp_l, inp_r, params):
    N, H, W, C = inp_l.shape
    return make_mugi_block(params, N, H, W, C)(inp_l, inp_r)


# -----------------------------------------------------------------------------
# Deterministic parameter init (canonical shapes, as in the PyTorch module).
# -----------------------------------------------------------------------------
def make_params(key, c):
    ks = jax.random.split(key, 20)
    rn = lambda k, shp, s=0.1: (jax.random.normal(k, shp) * s).astype(jnp.float32)
    return {
        "ln1_w": jnp.ones((1, c), jnp.float32) + rn(ks[0], (1, c), 0.05),
        "ln1_b": rn(ks[1], (1, c)),
        "w1":   rn(ks[2], (c, 2 * c)),
        "b1":   rn(ks[3], (1, 2 * c)),
        "dw_w": rn(ks[4], (9, 2 * c)),
        "dw_b": rn(ks[5], (1, 2 * c)),
        "ca_w": rn(ks[6], (c, c)),
        "ca_b": rn(ks[7], (1, c)),
        "w3":   rn(ks[8], (c, c)),
        "b3":   rn(ks[9], (1, c)),
        "ln2_w": jnp.ones((1, c), jnp.float32) + rn(ks[10], (1, c), 0.05),
        "ln2_b": rn(ks[11], (1, c)),
        "w4":   rn(ks[12], (c, 2 * c)),
        "b4":   rn(ks[13], (1, 2 * c)),
        "w5":   rn(ks[14], (c, c)),
        "b5":   rn(ks[15], (1, c)),
        # NOTE: PyTorch inits a_*/b_* to zeros; use small random values so the
        # full datapath actually contributes to the output in this synthetic test.
        "a_l":  rn(ks[16], (1, c)),
        "a_r":  rn(ks[17], (1, c)),
        "b_l":  rn(ks[18], (1, c)),
        "b_r":  rn(ks[19], (1, c)),
    }


# -----------------------------------------------------------------------------
# Pure-JAX reference (NHWC), faithful to the PyTorch module.
# -----------------------------------------------------------------------------
def ref_forward(inp_l, inp_r, p):
    C = inp_l.shape[-1]

    def ln(x, w, b):
        mu = x.mean(-1, keepdims=True)
        var = ((x - mu) ** 2).mean(-1, keepdims=True)
        return w.reshape(1, 1, 1, -1) * ((x - mu) / jnp.sqrt(var + EPS)) + b.reshape(1, 1, 1, -1)

    def c1(x, Wt, b):
        return jnp.einsum("nhwc,cd->nhwd", x, Wt) + b.reshape(1, 1, 1, -1)

    def dw(x, w9, b):
        C2 = x.shape[-1]
        k = w9.reshape(3, 3, 1, C2)
        out = jax.lax.conv_general_dilated(
            x, k, (1, 1), "SAME",
            dimension_numbers=("NHWC", "HWIO", "NHWC"),
            feature_group_count=C2)
        return out + b.reshape(1, 1, 1, -1)

    def cab(x, Wt, b):
        pooled = x.mean(axis=(1, 2))
        scale = pooled @ Wt + b
        return x * scale[:, None, None, :]

    x = ln(inp_l, p["ln1_w"], p["ln1_b"]); y = ln(inp_r, p["ln1_w"], p["ln1_b"])
    x = c1(x, p["w1"], p["b1"]); y = c1(y, p["w1"], p["b1"])
    x = dw(x, p["dw_w"], p["dw_b"]); y = dw(y, p["dw_w"], p["dw_b"])
    gx = x[..., :C] * y[..., C:]; gy = y[..., :C] * x[..., C:]
    gx = cab(gx, p["ca_w"], p["ca_b"]); gy = cab(gy, p["ca_w"], p["ca_b"])
    gx = c1(gx, p["w3"], p["b3"]); gy = c1(gy, p["w3"], p["b3"])
    x_skip = inp_l + gx * p["a_l"].reshape(1, 1, 1, -1)
    y_skip = inp_r + gy * p["a_r"].reshape(1, 1, 1, -1)
    x = ln(x_skip, p["ln2_w"], p["ln2_b"]); y = ln(y_skip, p["ln2_w"], p["ln2_b"])
    x = c1(x, p["w4"], p["b4"]); y = c1(y, p["w4"], p["b4"])
    gx = x[..., :C] * y[..., C:]; gy = y[..., :C] * x[..., C:]
    gx = c1(gx, p["w5"], p["b5"]); gy = c1(gy, p["w5"], p["b5"])
    out_l = x_skip + gx * p["b_l"].reshape(1, 1, 1, -1)
    out_r = y_skip + gy * p["b_r"].reshape(1, 1, 1, -1)
    return out_l, out_r


if __name__ == "__main__":
    N, C, H, W = 2, 4, 16, 16            # PyTorch NCHW (2,4,16,16) -> NHWC (2,16,16,4)
    key = jax.random.PRNGKey(0)
    k1, k2, k3 = jax.random.split(key, 3)
    inp_l = jax.random.normal(k1, (N, H, W, C), jnp.float32)
    inp_r = jax.random.normal(k2, (N, H, W, C), jnp.float32)
    params = make_params(k3, C)

    fwd = make_mugi_block(params, N, H, W, C)
    out_l, out_r = fwd(inp_l, inp_r)
    jax.block_until_ready((out_l, out_r))

    ref_l, ref_r = ref_forward(inp_l, inp_r, params)
    assert jnp.allclose(out_l, ref_l, atol=2e-4, rtol=2e-4), "left stream mismatch"
    assert jnp.allclose(out_r, ref_r, atol=2e-4, rtol=2e-4), "right stream mismatch"
    print("KERNEL_OK")
</pallas_src>

<mosaic_0001>
module attributes {stable_mosaic.version = 11 : i64} {
  func.func @kernel(%arg0: memref<32x128xf32, #tpu.memory_space<vmem>>, %arg1: memref<552x128xf32, #tpu.memory_space<vmem>>, %arg2: memref<336x256xf32, #tpu.memory_space<vmem>>, %arg3: memref<32x128xf32, #tpu.memory_space<vmem>>) attributes {dimension_semantics = [], scalar_prefetch = 0 : i64, scratch_operands = 0 : i64, tpu.core_type = #tpu.core_type<tc>} {
    %c0 = arith.constant 0 : index
    %c0_0 = arith.constant 0 : index
    %0 = vector.load %arg0[%c0, %c0_0] : memref<32x128xf32, #tpu.memory_space<vmem>>, vector<32x128xf32>
    %c0_1 = arith.constant 0 : index
    %c0_2 = arith.constant 0 : index
    %1 = vector.load %arg1[%c0_1, %c0_2] : memref<552x128xf32, #tpu.memory_space<vmem>>, vector<128x128xf32>
    %cst = arith.constant dense<0.000000e+00> : vector<32x128xf32>
    %2 = tpu.matmul %0, %1, %cst {dimension_numbers = #tpu.dot_dimension_numbers<[1], [0], [0], [1], [0, 0, 1, 1], [], []>} : vector<32x128xf32>, vector<128x128xf32>, vector<32x128xf32> -> vector<32x128xf32>
    %3 = arith.subf %0, %2 : vector<32x128xf32>
    %4 = arith.mulf %3, %3 : vector<32x128xf32>
    %cst_3 = arith.constant dense<0.000000e+00> : vector<32x128xf32>
    %5 = tpu.matmul %4, %1, %cst_3 {dimension_numbers = #tpu.dot_dimension_numbers<[1], [0], [0], [1], [0, 0, 1, 1], [], []>} : vector<32x128xf32>, vector<128x128xf32>, vector<32x128xf32> -> vector<32x128xf32>
    %cst_4 = arith.constant 9.99999997E-7 : f32
    %6 = vector.broadcast %cst_4 : f32 to vector<32x128xf32>
    %7 = arith.addf %5, %6 : vector<32x128xf32>
    %8 = math.rsqrt %7 : vector<32x128xf32>
    %9 = arith.mulf %3, %8 : vector<32x128xf32>
    %c0_5 = arith.constant 0 : index
    %c0_6 = arith.constant 0 : index
    %10 = vector.load %arg2[%c0_5, %c0_6] : memref<336x256xf32, #tpu.memory_space<vmem>>, vector<128x256xf32>
    %cst_7 = arith.constant dense<0.000000e+00> : vector<32x256xf32>
    %11 = tpu.matmul %9, %10, %cst_7 {dimension_numbers = #tpu.dot_dimension_numbers<[1], [0], [0], [1], [0, 0, 1, 1], [], []>} : vector<32x128xf32>, vector<128x256xf32>, vector<32x256xf32> -> vector<32x256xf32>
    %c330 = arith.constant 330 : index
    %c0_8 = arith.constant 0 : index
    %12 = vector.load %arg2[%c330, %c0_8] : memref<336x256xf32, #tpu.memory_space<vmem>>, vector<1x256xf32>
    %13 = vector.broadcast %12 : vector<1x256xf32> to vector<32x256xf32>
    %14 = arith.addf %11, %13 : vector<32x256xf32>
    %c256 = arith.constant 256 : index
    %c0_9 = arith.constant 0 : index
    %15 = vector.load %arg2[%c256, %c0_9] : memref<336x256xf32, #tpu.memory_space<vmem>>, vector<32x256xf32>
    %c288 = arith.constant 288 : index
    %c0_10 = arith.constant 0 : index
    %16 = vector.load %arg2[%c288, %c0_10] : memref<336x256xf32, #tpu.memory_space<vmem>>, vector<32x256xf32>
    %cst_11 = arith.constant 0.000000e+00 : f32
    %17 = vector.broadcast %cst_11 : f32 to vector<1x256xf32>
    %cst_12 = arith.constant 0.000000e+00 : f32
    %18 = vector.broadcast %cst_12 : f32 to vector<32x1xf32>
    %19 = vector.extract_strided_slice %14 {offsets = [0, 0], sizes = [31, 256], strides = [1, 1]} : vector<32x256xf32> to vector<31x256xf32>
    %20 = tpu.concatenate %17, %19 in 0 : vector<1x256xf32>, vector<31x256xf32> -> vector<32x256xf32>
    %21 = arith.mulf %20, %15 : vector<32x256xf32>
    %22 = vector.extract_strided_slice %14 {offsets = [1, 0], sizes = [31, 256], strides = [1, 1]} : vector<32x256xf32> to vector<31x256xf32>
    %23 = tpu.concatenate %22, %17 in 0 : vector<31x256xf32>, vector<1x256xf32> -> vector<32x256xf32>
    %24 = arith.mulf %23, %16 : vector<32x256xf32>
    %c320 = arith.constant 320 : index
    %c0_13 = arith.constant 0 : index
    %25 = vector.load %arg2[%c320, %c0_13] : memref<336x256xf32, #tpu.memory_space<vmem>>, vector<1x256xf32>
    %26 = vector.broadcast %25 : vector<1x256xf32> to vector<32x256xf32>
    %27 = arith.mulf %21, %26 : vector<32x256xf32>
    %c323 = arith.constant 323 : index
    %c0_14 = arith.constant 0 : index
    %28 = vector.load %arg2[%c323, %c0_14] : memref<336x256xf32, #tpu.memory_space<vmem>>, vector<1x256xf32>
    %29 = vector.broadcast %28 : vector<1x256xf32> to vector<32x256xf32>
    %30 = arith.mulf %14, %29 : vector<32x256xf32>
    %31 = arith.addf %27, %30 : vector<32x256xf32>
    %c326 = arith.constant 326 : index
    %c0_15 = arith.constant 0 : index
    %32 = vector.load %arg2[%c326, %c0_15] : memref<336x256xf32, #tpu.memory_space<vmem>>, vector<1x256xf32>
    %33 = vector.broadcast %32 : vector<1x256xf32> to vector<32x256xf32>
    %34 = arith.mulf %24, %33 : vector<32x256xf32>
    %35 = arith.addf %31, %34 : vector<32x256xf32>
    %c321 = arith.constant 321 : index
    %c0_16 = arith.constant 0 : index
    %36 = vector.load %arg2[%c321, %c0_16] : memref<336x256xf32, #tpu.memory_space<vmem>>, vector<1x256xf32>
    %37 = vector.broadcast %36 : vector<1x256xf32> to vector<32x256xf32>
    %38 = arith.mulf %21, %37 : vector<32x256xf32>
    %c324 = arith.constant 324 : index
    %c0_17 = arith.constant 0 : index
    %39 = vector.load %arg2[%c324, %c0_17] : memref<336x256xf32, #tpu.memory_space<vmem>>, vector<1x256xf32>
    %40 = vector.broadcast %39 : vector<1x256xf32> to vector<32x256xf32>
    %41 = arith.mulf %14, %40 : vector<32x256xf32>
    %42 = arith.addf %38, %41 : vector<32x256xf32>
    %c327 = arith.constant 327 : index
    %c0_18 = arith.constant 0 : index
    %43 = vector.load %arg2[%c327, %c0_18] : memref<336x256xf32, #tpu.memory_space<vmem>>, vector<1x256xf32>
    %44 = vector.broadcast %43 : vector<1x256xf32> to vector<32x256xf32>
    %45 = arith.mulf %24, %44 : vector<32x256xf32>
    %46 = arith.addf %42, %45 : vector<32x256xf32>
    %c322 = arith.constant 322 : index
    %c0_19 = arith.constant 0 : index
    %47 = vector.load %arg2[%c322, %c0_19] : memref<336x256xf32, #tpu.memory_space<vmem>>, vector<1x256xf32>
    %48 = vector.broadcast %47 : vector<1x256xf32> to vector<32x256xf32>
    %49 = arith.mulf %21, %48 : vector<32x256xf32>
    %c325 = arith.constant 325 : index
    %c0_20 = arith.constant 0 : index
    %50 = vector.load %arg2[%c325, %c0_20] : memref<336x256xf32, #tpu.memory_space<vmem>>, vector<1x256xf32>
    %51 = vector.broadcast %50 : vector<1x256xf32> to vector<32x256xf32>
    %52 = arith.mulf %14, %51 : vector<32x256xf32>
    %53 = arith.addf %49, %52 : vector<32x256xf32>
    %c328 = arith.constant 328 : index
    %c0_21 = arith.constant 0 : index
    %54 = vector.load %arg2[%c328, %c0_21] : memref<336x256xf32, #tpu.memory_space<vmem>>, vector<1x256xf32>
    %55 = vector.broadcast %54 : vector<1x256xf32> to vector<32x256xf32>
    %56 = arith.mulf %24, %55 : vector<32x256xf32>
    %57 = arith.addf %53, %56 : vector<32x256xf32>
    %58 = vector.extract_strided_slice %35 {offsets = [0, 0], sizes = [32, 255], strides = [1, 1]} : vector<32x256xf32> to vector<32x255xf32>
    %59 = tpu.concatenate %18, %58 in 1 : vector<32x1xf32>, vector<32x255xf32> -> vector<32x256xf32>
    %60 = arith.addf %46, %59 : vector<32x256xf32>
    %61 = vector.extract_strided_slice %57 {offsets = [0, 1], sizes = [32, 255], strides = [1, 1]} : vector<32x256xf32> to vector<32x255xf32>
    %62 = tpu.concatenate %61, %18 in 1 : vector<32x255xf32>, vector<32x1xf32> -> vector<32x256xf32>
    %63 = arith.addf %60, %62 : vector<32x256xf32>
    %c329 = arith.constant 329 : index
    %c0_22 = arith.constant 0 : index
    %64 = vector.load %arg2[%c329, %c0_22] : memref<336x256xf32, #tpu.memory_space<vmem>>, vector<1x256xf32>
    %65 = vector.broadcast %64 : vector<1x256xf32> to vector<32x256xf32>
    %66 = arith.addf %63, %65 : vector<32x256xf32>
    %67 = vector.extract_strided_slice %66 {offsets = [0, 0], sizes = [32, 64], strides = [1, 1]} : vector<32x256xf32> to vector<32x64xf32>
    %68 = vector.extract_strided_slice %66 {offsets = [0, 192], sizes = [32, 64], strides = [1, 1]} : vector<32x256xf32> to vector<32x64xf32>
    %69 = arith.mulf %67, %68 : vector<32x64xf32>
    %70 = vector.extract_strided_slice %66 {offsets = [0, 128], sizes = [32, 64], strides = [1, 1]} : vector<32x256xf32> to vector<32x64xf32>
    %71 = vector.extract_strided_slice %66 {offsets = [0, 64], sizes = [32, 64], strides = [1, 1]} : vector<32x256xf32> to vector<32x64xf32>
    %72 = arith.mulf %70, %71 : vector<32x64xf32>
    %73 = tpu.concatenate %69, %72 in 1 : vector<32x64xf32>, vector<32x64xf32> -> vector<32x128xf32>
    %c512 = arith.constant 512 : index
    %c0_23 = arith.constant 0 : index
    %74 = vector.load %arg1[%c512, %c0_23] : memref<552x128xf32, #tpu.memory_space<vmem>>, vector<32x32xf32>
    %cst_24 = arith.constant dense<0.000000e+00> : vector<32x128xf32>
    %75 = tpu.matmul %74, %73, %cst_24 {dimension_numbers = #tpu.dot_dimension_numbers<[1], [0], [0], [1], [0, 0, 1, 1], [], []>} : vector<32x32xf32>, vector<32x128xf32>, vector<32x128xf32> -> vector<32x128xf32>
    %c384 = arith.constant 384 : index
    %c0_25 = arith.constant 0 : index
    %76 = vector.load %arg1[%c384, %c0_25] : memref<552x128xf32, #tpu.memory_space<vmem>>, vector<128x128xf32>
    %cst_26 = arith.constant dense<0.000000e+00> : vector<32x128xf32>
    %77 = tpu.matmul %75, %76, %cst_26 {dimension_numbers = #tpu.dot_dimension_numbers<[1], [0], [0], [1], [0, 0, 1, 1], [], []>} : vector<32x128xf32>, vector<128x128xf32>, vector<32x128xf32> -> vector<32x128xf32>
    %c546 = arith.constant 546 : index
    %c0_27 = arith.constant 0 : index
    %78 = vector.load %arg1[%c546, %c0_27] : memref<552x128xf32, #tpu.memory_space<vmem>>, vector<1x128xf32>
    %79 = vector.broadcast %78 : vector<1x128xf32> to vector<32x128xf32>
    %80 = arith.addf %77, %79 : vector<32x128xf32>
    %81 = arith.mulf %73, %80 : vector<32x128xf32>
    %c128 = arith.constant 128 : index
    %c0_28 = arith.constant 0 : index
    %82 = vector.load %arg1[%c128, %c0_28] : memref<552x128xf32, #tpu.memory_space<vmem>>, vector<128x128xf32>
    %cst_29 = arith.constant dense<0.000000e+00> : vector<32x128xf32>
    %83 = tpu.matmul %81, %82, %cst_29 {dimension_numbers = #tpu.dot_dimension_numbers<[1], [0], [0], [1], [0, 0, 1, 1], [], []>} : vector<32x128xf32>, vector<128x128xf32>, vector<32x128xf32> -> vector<32x128xf32>
    %c544 = arith.constant 544 : index
    %c0_30 = arith.constant 0 : index
    %84 = vector.load %arg1[%c544, %c0_30] : memref<552x128xf32, #tpu.memory_space<vmem>>, vector<1x128xf32>
    %85 = vector.broadcast %84 : vector<1x128xf32> to vector<32x128xf32>
    %86 = arith.addf %83, %85 : vector<32x128xf32>
    %c547 = arith.constant 547 : index
    %c0_31 = arith.constant 0 : index
    %87 = vector.load %arg1[%c547, %c0_31] : memref<552x128xf32, #tpu.memory_space<vmem>>, vector<1x128xf32>
    %88 = vector.broadcast %87 : vector<1x128xf32> to vector<32x128xf32>
    %89 = arith.mulf %86, %88 : vector<32x128xf32>
    %90 = arith.addf %0, %89 : vector<32x128xf32>
    %c0_32 = arith.constant 0 : index
    %c0_33 = arith.constant 0 : index
    %91 = vector.load %arg1[%c0_32, %c0_33] : memref<552x128xf32, #tpu.memory_space<vmem>>, vector<128x128xf32>
    %cst_34 = arith.constant dense<0.000000e+00> : vector<32x128xf32>
    %92 = tpu.matmul %90, %91, %cst_34 {dimension_numbers = #tpu.dot_dimension_numbers<[1], [0], [0], [1], [0, 0, 1, 1], [], []>} : vector<32x128xf32>, vector<128x128xf32>, vector<32x128xf32> -> vector<32x128xf32>
    %93 = arith.subf %90, %92 : vector<32x128xf32>
    %94 = arith.mulf %93, %93 : vector<32x128xf32>
    %cst_35 = arith.constant dense<0.000000e+00> : vector<32x128xf32>
    %95 = tpu.matmul %94, %91, %cst_35 {dimension_numbers = #tpu.dot_dimension_numbers<[1], [0], [0], [1], [0, 0, 1, 1], [], []>} : vector<32x128xf32>, vector<128x128xf32>, vector<32x128xf32> -> vector<32x128xf32>
    %cst_36 = arith.constant 9.99999997E-7 : f32
    %96 = vector.broadcast %cst_36 : f32 to vector<32x128xf32>
    %97 = arith.addf %95, %96 : vector<32x128xf32>
    %98 = math.rsqrt %97 : vector<32x128xf32>
    %99 = arith.mulf %93, %98 : vector<32x128xf32>
    %c128_37 = arith.constant 128 : index
    %c0_38 = arith.constant 0 : index
    %100 = vector.load %arg2[%c128_37, %c0_38] : memref<336x256xf32, #tpu.memory_space<vmem>>, vector<128x256xf32>
    %cst_39 = arith.constant dense<0.000000e+00> : vector<32x256xf32>
    %101 = tpu.matmul %99, %100, %cst_39 {dimension_numbers = #tpu.dot_dimension_numbers<[1], [0], [0], [1], [0, 0, 1, 1], [], []>} : vector<32x128xf32>, vector<128x256xf32>, vector<32x256xf32> -> vector<32x256xf32>
    %c331 = arith.constant 331 : index
    %c0_40 = arith.constant 0 : index
    %102 = vector.load %arg2[%c331, %c0_40] : memref<336x256xf32, #tpu.memory_space<vmem>>, vector<1x256xf32>
    %103 = vector.broadcast %102 : vector<1x256xf32> to vector<32x256xf32>
    %104 = arith.addf %101, %103 : vector<32x256xf32>
    %105 = vector.extract_strided_slice %104 {offsets = [0, 0], sizes = [32, 64], strides = [1, 1]} : vector<32x256xf32> to vector<32x64xf32>
    %106 = vector.extract_strided_slice %104 {offsets = [0, 192], sizes = [32, 64], strides = [1, 1]} : vector<32x256xf32> to vector<32x64xf32>
    %107 = arith.mulf %105, %106 : vector<32x64xf32>
    %108 = vector.extract_strided_slice %104 {offsets = [0, 128], sizes = [32, 64], strides = [1, 1]} : vector<32x256xf32> to vector<32x64xf32>
    %109 = vector.extract_strided_slice %104 {offsets = [0, 64], sizes = [32, 64], strides = [1, 1]} : vector<32x256xf32> to vector<32x64xf32>
    %110 = arith.mulf %108, %109 : vector<32x64xf32>
    %111 = tpu.concatenate %107, %110 in 1 : vector<32x64xf32>, vector<32x64xf32> -> vector<32x128xf32>
    %c256_41 = arith.constant 256 : index
    %c0_42 = arith.constant 0 : index
    %112 = vector.load %arg1[%c256_41, %c0_42] : memref<552x128xf32, #tpu.memory_space<vmem>>, vector<128x128xf32>
    %cst_43 = arith.constant dense<0.000000e+00> : vector<32x128xf32>
    %113 = tpu.matmul %111, %112, %cst_43 {dimension_numbers = #tpu.dot_dimension_numbers<[1], [0], [0], [1], [0, 0, 1, 1], [], []>} : vector<32x128xf32>, vector<128x128xf32>, vector<32x128xf32> -> vector<32x128xf32>
    %c545 = arith.constant 545 : index
    %c0_44 = arith.constant 0 : index
    %114 = vector.load %arg1[%c545, %c0_44] : memref<552x128xf32, #tpu.memory_space<vmem>>, vector<1x128xf32>
    %115 = vector.broadcast %114 : vector<1x128xf32> to vector<32x128xf32>
    %116 = arith.addf %113, %115 : vector<32x128xf32>
    %c548 = arith.constant 548 : index
    %c0_45 = arith.constant 0 : index
    %117 = vector.load %arg1[%c548, %c0_45] : memref<552x128xf32, #tpu.memory_space<vmem>>, vector<1x128xf32>
    %118 = vector.broadcast %117 : vector<1x128xf32> to vector<32x128xf32>
    %119 = arith.mulf %116, %118 : vector<32x128xf32>
    %120 = arith.addf %90, %119 : vector<32x128xf32>
    %c0_46 = arith.constant 0 : index
    %c0_47 = arith.constant 0 : index
    %121 = vector.load %arg3[%c0_46, %c0_47] : memref<32x128xf32, #tpu.memory_space<vmem>>, vector<32x128xf32>
    tpu.vector_store %arg3[%c0_46, %c0_47], %120 {strides = array<i32>} : memref<32x128xf32, #tpu.memory_space<vmem>>, vector<32x128xf32>,
    return
  }
}

</mosaic_0001>

<llo_original>
// kernel: fwd.1
$region0: #{fwd.1}
  #allocation0 [shape = 'u32[]', space=smem, size = 0x4, offset = 0x4, fixed_abs, tag = 'smem constant byte address 0x4 - core index']
  #allocation1 [shape = 'u32[144,128]{1,0:T(1,128)}', space=vmem, size = 0x12000, scoped, tag = 'internal scratch']
  %s0 = inlined_call_operand.vmem [shape: f32[32,128], index: 0, kind: input, shape index: {}]
  %s1 = inlined_call_operand.vmem [shape: f32[552,128], index: 1, kind: input, shape index: {}]
  %s2 = inlined_call_operand.vmem [shape: f32[336,256], index: 2, kind: input, shape index: {}]
  %s3 = inlined_call_operand.vmem [shape: f32[32,128], index: 3, kind: output, shape index: {}]
  %s4 = sld [smem:[#allocation0]]
  $region22: #{fwd.1} parent=0
    _
  %s6 = ssub.s32 1, %s4
  %s7 = scalar_select 0, %s6, %s4
  // Predicated region
  $region2: #{fwd.1} parent=0 // pred_check
    _
  $region3: #{fwd.1} parent=0 // pred_check_branch
    %9 = sbr.rel (0) target = $region5
  $region4: #{fwd.1} parent=0 // pred_region
    _
  $region5: #{fwd.1} parent=0 // pred_fallthru
    _
  // Predicated region
  $region6: #{fwd.1} parent=0 // pred_check
    _
  $region7: #{fwd.1} parent=0 // pred_check_branch
    %11 = sbr.rel (0) target = $region9
  $region8: #{fwd.1} parent=0 // pred_region
    _
  $region9: #{fwd.1} parent=0 // pred_fallthru
    _
  // Predicated region
  $region10: #{fwd.1} parent=0 // pred_check
    _
  $region11: #{fwd.1} parent=0 // pred_check_branch
    %13 = sbr.rel (0) target = $region13
  $region12: #{fwd.1} parent=0 // pred_region
    _
  $region13: #{fwd.1} parent=0 // pred_fallthru
    _
  %v14 = vld [vmem:[%s0] sm:$0xff]
  %v15 = vld [vmem:[%s0 + $0x8] sm:$0xff]
  %v16 = vld [vmem:[%s0 + $0x10] sm:$0xff]
  %v17 = vld [vmem:[%s0 + $0x18] sm:$0xff]
  %v18 = vld [vmem:[%s1] sm:$0xff]
  %v19 = vld [vmem:[%s1 + $0x8] sm:$0xff]
  %v20 = vld [vmem:[%s1 + $0x10] sm:$0xff]
  %v21 = vld [vmem:[%s1 + $0x18] sm:$0xff]
  %v22 = vld [vmem:[%s1 + $0x20] sm:$0xff]
  %v23 = vld [vmem:[%s1 + $0x28] sm:$0xff]
  %v24 = vld [vmem:[%s1 + $0x30] sm:$0xff]
  %v25 = vld [vmem:[%s1 + $0x38] sm:$0xff]
  %v26 = vld [vmem:[%s1 + $0x40] sm:$0xff]
  %v27 = vld [vmem:[%s1 + $0x48] sm:$0xff]
  %v28 = vld [vmem:[%s1 + $0x50] sm:$0xff]
  %v29 = vld [vmem:[%s1 + $0x58] sm:$0xff]
  %v30 = vld [vmem:[%s1 + $0x60] sm:$0xff]
  %v31 = vld [vmem:[%s1 + $0x68] sm:$0xff]
  %v32 = vld [vmem:[%s1 + $0x70] sm:$0xff]
  %v33 = vld [vmem:[%s1 + $0x78] sm:$0xff]
  %34 = vmatprep.subr.mxu0 0.0
  %35 = vmatpush1.msra.mxu0 %v18
  %36 = vmatprep.subr.mxu0 0.0
  %37 = vmatpush1.msra.mxu0 %v19
  %38 = vmatprep.subr.mxu0 0.0
  %39 = vmatpush1.msra.mxu0 %v20
  %40 = vmatprep.subr.mxu0 0.0
  %41 = vmatpush1.msra.mxu0 %v21
  %42 = vmatprep.subr.mxu0 0.0
  %43 = vmatpush1.msra.mxu0 %v22
  %44 = vmatprep.subr.mxu0 0.0
  %45 = vmatpush1.msra.mxu0 %v23
  %46 = vmatprep.subr.mxu0 0.0
  %47 = vmatpush1.msra.mxu0 %v24
  %48 = vmatprep.subr.mxu0 0.0
  %49 = vmatpush1.msra.mxu0 %v25
  %50 = vmatprep.subr.mxu0 0.0
  %51 = vmatpush1.msra.mxu0 %v26
  %52 = vmatprep.subr.mxu0 0.0
  %53 = vmatpush1.msra.mxu0 %v27
  %54 = vmatprep.subr.mxu0 0.0
  %55 = vmatpush1.msra.mxu0 %v28
  %56 = vmatprep.subr.mxu0 0.0
  %57 = vmatpush1.msra.mxu0 %v29
  %58 = vmatprep.subr.mxu0 0.0
  %59 = vmatpush1.msra.mxu0 %v30
  %60 = vmatprep.subr.mxu0 0.0
  %61 = vmatpush1.msra.mxu0 %v31
  %62 = vmatprep.subr.mxu0 0.0
  %63 = vmatpush1.msra.mxu0 %v32
  %64 = vmatprep.subr.mxu0 0.0
  %65 = vmatpush1.msra.mxu0 %v33
  %66 = vmatprep.subr.mxu0 0.0
  %67 = vmatpush1.msra.mxu0 0.0
  %68 = vmatprep.subr.mxu0 0.0
  %69 = vmatpush1.msra.mxu0 0.0
  %70 = vmatprep.subr.mxu0 0.0
  %71 = vmatpush1.msra.mxu0 0.0
  %72 = vmatprep.subr.mxu0 0.0
  %73 = vmatpush1.msra.mxu0 0.0
  %74 = vmatprep.subr.mxu0 0.0
  %75 = vmatpush1.msra.mxu0 0.0
  %76 = vmatprep.subr.mxu0 0.0
  %77 = vmatpush1.msra.mxu0 0.0
  %78 = vmatprep.subr.mxu0 0.0
  %79 = vmatpush1.msra.mxu0 0.0
  %80 = vmatprep.subr.mxu0 0.0
  %81 = vmatpush1.msra.mxu0 0.0
  %82 = vmatprep.subr.mxu0 0.0
  %83 = vmatpush1.msra.mxu0 0.0
  %84 = vmatprep.subr.mxu0 0.0
  %85 = vmatpush1.msra.mxu0 0.0
  %86 = vmatprep.subr.mxu0 0.0
  %87 = vmatpush1.msra.mxu0 0.0
  %88 = vmatprep.subr.mxu0 0.0
  %89 = vmatpush1.msra.mxu0 0.0
  %90 = vmatprep.subr.mxu0 0.0
  %91 = vmatpush1.msra.mxu0 0.0
  %92 = vmatprep.subr.mxu0 0.0
  %93 = vmatpush1.msra.mxu0 0.0
  %94 = vmatprep.subr.mxu0 0.0
  %95 = vmatpush1.msra.mxu0 0.0
  %96 = vmatprep.subr.mxu0 0.0
  %97 = vmatpush1.msra.mxu0 0.0
  %98 = vmatprep.mubr.f32.mxu0 0.0
  %99 = vmatmul.mubr.f32.gmra.mrb[0].mxu0 %v14
  %v100 = vpop.f32.mrb[0].mxu0
  %v101 = vadd.f32 0.0, %v100
  %v102 = vpop.f32.mrb[0].mxu0
  %103 = vmatprep.mubr.f32.mxu0 0.0
  %104 = vmatmul.mubr.f32.gmra.mrb[0].mxu0 %v15
  %v105 = vpop.f32.mrb[0].mxu0
  %v106 = vadd.f32 0.0, %v105
  %v107 = vpop.f32.mrb[0].mxu0
  %108 = vmatprep.mubr.f32.mxu0 0.0
  %109 = vmatmul.mubr.f32.gmra.mrb[0].mxu0 %v16
  %v110 = vpop.f32.mrb[0].mxu0
  %v111 = vadd.f32 0.0, %v110
  %v112 = vpop.f32.mrb[0].mxu0
  %113 = vmatprep.mubr.f32.mxu0 0.0
  %114 = vmatmul.mubr.f32.gmra.mrb[0].mxu0 %v17
  %v115 = vpop.f32.mrb[0].mxu0
  %v116 = vadd.f32 0.0, %v115
  %v117 = vpop.f32.mrb[0].mxu0
  %118 = vdwg.mxu0
  %v119 = vsub.f32 %v14, %v101
  %v120 = vsub.f32 %v15, %v106
  %v121 = vsub.f32 %v16, %v111
  %v122 = vsub.f32 %v17, %v116
  %v123 = vmul.f32 %v119, %v119
  %v124 = vmul.f32 %v120, %v120
  %v125 = vmul.f32 %v121, %v121
  %v126 = vmul.f32 %v122, %v122
  %127 = vmatprep.subr.mxu0 0.0
  %128 = vmatpush1.msra.mxu0 %v18
  %129 = vmatprep.subr.mxu0 0.0
  %130 = vmatpush1.msra.mxu0 %v19
  %131 = vmatprep.subr.mxu0 0.0
  %132 = vmatpush1.msra.mxu0 %v20
  %133 = vmatprep.subr.mxu0 0.0
  %134 = vmatpush1.msra.mxu0 %v21
  %135 = vmatprep.subr.mxu0 0.0
  %136 = vmatpush1.msra.mxu0 %v22
  %137 = vmatprep.subr.mxu0 0.0
  %138 = vmatpush1.msra.mxu0 %v23
  %139 = vmatprep.subr.mxu0 0.0
  %140 = vmatpush1.msra.mxu0 %v24
  %141 = vmatprep.subr.mxu0 0.0
  %142 = vmatpush1.msra.mxu0 %v25
  %143 = vmatprep.subr.mxu0 0.0
  %144 = vmatpush1.msra.mxu0 %v26
  %145 = vmatprep.subr.mxu0 0.0
  %146 = vmatpush1.msra.mxu0 %v27
  %147 = vmatprep.subr.mxu0 0.0
  %148 = vmatpush1.msra.mxu0 %v28
  %149 = vmatprep.subr.mxu0 0.0
  %150 = vmatpush1.msra.mxu0 %v29
  %151 = vmatprep.subr.mxu0 0.0
  %152 = vmatpush1.msra.mxu0 %v30
  %153 = vmatprep.subr.mxu0 0.0
  %154 = vmatpush1.msra.mxu0 %v31
  %155 = vmatprep.subr.mxu0 0.0
  %156 = vmatpush1.msra.mxu0 %v32
  %157 = vmatprep.subr.mxu0 0.0
  %158 = vmatpush1.msra.mxu0 %v33
  %159 = vmatprep.subr.mxu0 0.0
  %160 = vmatpush1.msra.mxu0 0.0
  %161 = vmatprep.subr.mxu0 0.0
  %162 = vmatpush1.msra.mxu0 0.0
  %163 = vmatprep.subr.mxu0 0.0
  %164 = vmatpush1.msra.mxu0 0.0
  %165 = vmatprep.subr.mxu0 0.0
  %166 = vmatpush1.msra.mxu0 0.0
  %167 = vmatprep.subr.mxu0 0.0
  %168 = vmatpush1.msra.mxu0 0.0
  %169 = vmatprep.subr.mxu0 0.0
  %170 = vmatpush1.msra.mxu0 0.0
  %171 = vmatprep.subr.mxu0 0.0
  %172 = vmatpush1.msra.mxu0 0.0
  %173 = vmatprep.subr.mxu0 0.0
  %174 = vmatpush1.msra.mxu0 0.0
  %175 = vmatprep.subr.mxu0 0.0
  %176 = vmatpush1.msra.mxu0 0.0
  %177 = vmatprep.subr.mxu0 0.0
  %178 = vmatpush1.msra.mxu0 0.0
  %179 = vmatprep.subr.mxu0 0.0
  %180 = vmatpush1.msra.mxu0 0.0
  %181 = vmatprep.subr.mxu0 0.0
  %182 = vmatpush1.msra.mxu0 0.0
  %183 = vmatprep.subr.mxu0 0.0
  %184 = vmatpush1.msra.mxu0 0.0
  %185 = vmatprep.subr.mxu0 0.0
  %186 = vmatpush1.msra.mxu0 0.0
  %187 = vmatprep.subr.mxu0 0.0
  %188 = vmatpush1.msra.mxu0 0.0
  %189 = vmatprep.subr.mxu0 0.0
  %190 = vmatpush1.msra.mxu0 0.0
  %191 = vmatprep.mubr.f32.mxu0 0.0
  %192 = vmatmul.mubr.f32.gmra.mrb[0].mxu0 %v123
  %v193 = vpop.f32.mrb[0].mxu0
  %v194 = vadd.f32 1e-06, %v193
  %v195 = vpop.f32.mrb[0].mxu0
  %196 = vmatprep.mubr.f32.mxu0 0.0
  %197 = vmatmul.mubr.f32.gmra.mrb[0].mxu0 %v124
  %v198 = vpop.f32.mrb[0].mxu0
  %v199 = vadd.f32 1e-06, %v198
  %v200 = vpop.f32.mrb[0].mxu0
  %201 = vmatprep.mubr.f32.mxu0 0.0
  %202 = vmatmul.mubr.f32.gmra.mrb[0].mxu0 %v125
  %v203 = vpop.f32.mrb[0].mxu0
  %v204 = vadd.f32 1e-06, %v203
  %v205 = vpop.f32.mrb[0].mxu0
  %206 = vmatprep.mubr.f32.mxu0 0.0
  %207 = vmatmul.mubr.f32.gmra.mrb[0].mxu0 %v126
  %v208 = vpop.f32.mrb[0].mxu0
  %v209 = vadd.f32 1e-06, %v208
  %v210 = vpop.f32.mrb[0].mxu0
  %211 = vdwg.mxu0
  %v212 = vrsqrt.pop %v194
  %v213 = vrsqrt.pop %v199
  %v214 = vrsqrt.pop %v204
  %v215 = vrsqrt.pop %v209
  %v216 = vmul.f32 %v119, %v212
  %v217 = vmul.f32 %v120, %v213
  %v218 = vmul.f32 %v121, %v214
  %v219 = vmul.f32 %v122, %v215
  %v220 = vld [vmem:[%s2] sm:$0xff]
  %v221 = vld [vmem:[%s2 + $0x8] sm:$0xff]
  %v222 = vld [vmem:[%s2 + $0x10] sm:$0xff]
  %v223 = vld [vmem:[%s2 + $0x18] sm:$0xff]
  %v224 = vld [vmem:[%s2 + $0x20] sm:$0xff]
  %v225 = vld [vmem:[%s2 + $0x28] sm:$0xff]
  %v226 = vld [vmem:[%s2 + $0x30] sm:$0xff]
  %v227 = vld [vmem:[%s2 + $0x38] sm:$0xff]
  %v228 = vld [vmem:[%s2 + $0x40] sm:$0xff]
  %v229 = vld [vmem:[%s2 + $0x48] sm:$0xff]
  %v230 = vld [vmem:[%s2 + $0x50] sm:$0xff]
  %v231 = vld [vmem:[%s2 + $0x58] sm:$0xff]
  %v232 = vld [vmem:[%s2 + $0x60] sm:$0xff]
  %v233 = vld [vmem:[%s2 + $0x68] sm:$0xff]
  %v234 = vld [vmem:[%s2 + $0x70] sm:$0xff]
  %v235 = vld [vmem:[%s2 + $0x78] sm:$0xff]
  %v236 = vld [vmem:[%s2 + $0x80] sm:$0xff]
  %v237 = vld [vmem:[%s2 + $0x88] sm:$0xff]
  %v238 = vld [vmem:[%s2 + $0x90] sm:$0xff]
  %v239 = vld [vmem:[%s2 + $0x98] sm:$0xff]
  %v240 = vld [vmem:[%s2 + $0xa0] sm:$0xff]
  %v241 = vld [vmem:[%s2 + $0xa8] sm:$0xff]
  %v242 = vld [vmem:[%s2 + $0xb0] sm:$0xff]
  %v243 = vld [vmem:[%s2 + $0xb8] sm:$0xff]
  %v244 = vld [vmem:[%s2 + $0xc0] sm:$0xff]
  %v245 = vld [vmem:[%s2 + $0xc8] sm:$0xff]
  %v246 = vld [vmem:[%s2 + $0xd0] sm:$0xff]
  %v247 = vld [vmem:[%s2 + $0xd8] sm:$0xff]
  %v248 = vld [vmem:[%s2 + $0xe0] sm:$0xff]
  %v249 = vld [vmem:[%s2 + $0xe8] sm:$0xff]
  %v250 = vld [vmem:[%s2 + $0xf0] sm:$0xff]
  %v251 = vld [vmem:[%s2 + $0xf8] sm:$0xff]
  %s252 = scalar_lea.vmem %s2, 658
  %v253 = vld [vmem:[%s252] ss:$8 sm:$0x3]
  %v255 = vlaneseq
  %v256 = vshrl.u32 %v255, 7
  %v257 = vsub.s32 0, %v256
  %v258 = vrot.slane %v253, %v257
  %v259 = vlaneseq
  %v260 = vshrl.u32 %v259, 7
  %v261 = vsub.s32 1, %v260
  %v262 = vrot.slane %v253, %v261
  %265 = vmatprep.subr.mxu0 %v221
  %266 = vmatpush1.msra.mxu0 %v220
  %267 = vmatprep.subr.mxu0 %v223
  %268 = vmatpush1.msra.mxu0 %v222
  %269 = vmatprep.subr.mxu0 %v225
  %270 = vmatpush1.msra.mxu0 %v224
  %271 = vmatprep.subr.mxu0 %v227
  %272 = vmatpush1.msra.mxu0 %v226
  %273 = vmatprep.subr.mxu0 %v229
  %274 = vmatpush1.msra.mxu0 %v228
  %275 = vmatprep.subr.mxu0 %v231
  %276 = vmatpush1.msra.mxu0 %v230
  %277 = vmatprep.subr.mxu0 %v233
  %278 = vmatpush1.msra.mxu0 %v232
  %279 = vmatprep.subr.mxu0 %v235
  %280 = vmatpush1.msra.mxu0 %v234
  %281 = vmatprep.subr.mxu0 %v237
  %282 = vmatpush1.msra.mxu0 %v236
  %283 = vmatprep.subr.mxu0 %v239
  %284 = vmatpush1.msra.mxu0 %v238
  %285 = vmatprep.subr.mxu0 %v241
  %286 = vmatpush1.msra.mxu0 %v240
  %287 = vmatprep.subr.mxu0 %v243
  %288 = vmatpush1.msra.mxu0 %v242
  %289 = vmatprep.subr.mxu0 %v245
  %290 = vmatpush1.msra.mxu0 %v244
  %291 = vmatprep.subr.mxu0 %v247
  %292 = vmatpush1.msra.mxu0 %v246
  %293 = vmatprep.subr.mxu0 %v249
  %294 = vmatpush1.msra.mxu0 %v248
  %295 = vmatprep.subr.mxu0 %v251
  %296 = vmatpush1.msra.mxu0 %v250
  %297 = vmatprep.subr.mxu0 0.0
  %298 = vmatpush1.msra.mxu0 0.0
  %299 = vmatprep.subr.mxu0 0.0
  %300 = vmatpush1.msra.mxu0 0.0
  %301 = vmatprep.subr.mxu0 0.0
  %302 = vmatpush1.msra.mxu0 0.0
  %303 = vmatprep.subr.mxu0 0.0
  %304 = vmatpush1.msra.mxu0 0.0
  %305 = vmatprep.subr.mxu0 0.0
  %306 = vmatpush1.msra.mxu0 0.0
  %307 = vmatprep.subr.mxu0 0.0
  %308 = vmatpush1.msra.mxu0 0.0
  %309 = vmatprep.subr.mxu0 0.0
  %310 = vmatpush1.msra.mxu0 0.0
  %311 = vmatprep.subr.mxu0 0.0
  %312 = vmatpush1.msra.mxu0 0.0
  %313 = vmatprep.subr.mxu0 0.0
  %314 = vmatpush1.msra.mxu0 0.0
  %315 = vmatprep.subr.mxu0 0.0
  %316 = vmatpush1.msra.mxu0 0.0
  %317 = vmatprep.subr.mxu0 0.0
  %318 = vmatpush1.msra.mxu0 0.0
  %319 = vmatprep.subr.mxu0 0.0
  %320 = vmatpush1.msra.mxu0 0.0
  %321 = vmatprep.subr.mxu0 0.0
  %322 = vmatpush1.msra.mxu0 0.0
  %323 = vmatprep.subr.mxu0 0.0
  %324 = vmatpush1.msra.mxu0 0.0
  %325 = vmatprep.subr.mxu0 0.0
  %326 = vmatpush1.msra.mxu0 0.0
  %327 = vmatprep.subr.mxu0 0.0
  %328 = vmatpush1.msra.mxu0 0.0
  %329 = vmatprep.mubr.f32.mxu0 0.0
  %330 = vmatmul.mubr.f32.gmra.mrb[0].mxu0 %v216
  %v331 = vpop.f32.mrb[0].mxu0
  %v332 = vadd.f32 %v258, %v331
  %v333 = vpop.f32.mrb[0].mxu0
  %v334 = vadd.f32 %v262, %v333
  %335 = vmatprep.mubr.f32.mxu0 0.0
  %336 = vmatmul.mubr.f32.gmra.mrb[0].mxu0 %v217
  %v337 = vpop.f32.mrb[0].mxu0
  %v338 = vadd.f32 %v258, %v337
  %v339 = vpop.f32.mrb[0].mxu0
  %v340 = vadd.f32 %v262, %v339
  %341 = vmatprep.mubr.f32.mxu0 0.0
  %342 = vmatmul.mubr.f32.gmra.mrb[0].mxu0 %v218
  %v343 = vpop.f32.mrb[0].mxu0
  %v344 = vadd.f32 %v258, %v343
  %v345 = vpop.f32.mrb[0].mxu0
  %v346 = vadd.f32 %v262, %v345
  %347 = vmatprep.mubr.f32.mxu0 0.0
  %348 = vmatmul.mubr.f32.gmra.mrb[0].mxu0 %v219
  %v349 = vpop.f32.mrb[0].mxu0
  %v350 = vadd.f32 %v258, %v349
  %v351 = vpop.f32.mrb[0].mxu0
  %v352 = vadd.f32 %v262, %v351
  %353 = vdwg.mxu0
  %v354 = vld [vmem:[%s2 + $0x200] sm:$0xff]
  %v355 = vld [vmem:[%s2 + $0x208] sm:$0xff]
  %v356 = vld [vmem:[%s2 + $0x210] sm:$0xff]
  %v357 = vld [vmem:[%s2 + $0x218] sm:$0xff]
  %v358 = vld [vmem:[%s2 + $0x220] sm:$0xff]
  %v359 = vld [vmem:[%s2 + $0x228] sm:$0xff]
  %v360 = vld [vmem:[%s2 + $0x230] sm:$0xff]
  %v361 = vld [vmem:[%s2 + $0x238] sm:$0xff]
  %v362 = vld [vmem:[%s2 + $0x240] sm:$0xff]
  %v363 = vld [vmem:[%s2 + $0x248] sm:$0xff]
  %v364 = vld [vmem:[%s2 + $0x250] sm:$0xff]
  %v365 = vld [vmem:[%s2 + $0x258] sm:$0xff]
  %v366 = vld [vmem:[%s2 + $0x260] sm:$0xff]
  %v367 = vld [vmem:[%s2 + $0x268] sm:$0xff]
  %v368 = vld [vmem:[%s2 + $0x270] sm:$0xff]
  %v369 = vld [vmem:[%s2 + $0x278] sm:$0xff]
  %vm378 = vcmask 1040384
  %v379 = vrot.slane %v332, 7
  %v380 = vrot.slane %v334, 7
  %v381 = vrot.slane %v338, 7
  %v382 = vsel %vm378, %v379, %v381
  %v383 = vrot.slane %v340, 7
  %v384 = vsel %vm378, %v380, %v383
  %v385 = vrot.slane %v344, 7
  %v386 = vsel %vm378, %v381, %v385
  %v387 = vrot.slane %v346, 7
  %v388 = vsel %vm378, %v383, %v387
  %v389 = vrot.slane %v350, 7
  %v390 = vsel %vm378, %v385, %v389
  %v391 = vrot.slane %v352, 7
  %v392 = vsel %vm378, %v387, %v391
  %v401 = vsel %vm378, 0.0, %v379
  %v402 = vsel %vm378, 0.0, %v380
  %v403 = vmul.f32 %v401, %v354
  %v404 = vmul.f32 %v402, %v355
  %v405 = vmul.f32 %v382, %v356
  %v406 = vmul.f32 %v384, %v357
  %v407 = vmul.f32 %v386, %v358
  %v408 = vmul.f32 %v388, %v359
  %v409 = vmul.f32 %v390, %v360
  %v410 = vmul.f32 %v392, %v361
  %vm411 = vcmask 1046528
  %v412 = vrot.slane %v332, 1
  %v413 = vrot.slane %v338, 1
  %v414 = vsel %vm411, %v412, %v413
  %v415 = vrot.slane %v334, 1
  %v416 = vrot.slane %v340, 1
  %v417 = vsel %vm411, %v415, %v416
  %v418 = vrot.slane %v344, 1
  %v419 = vsel %vm411, %v413, %v418
  %v420 = vrot.slane %v346, 1
  %v421 = vsel %vm411, %v416, %v420
  %v422 = vrot.slane %v350, 1
  %v423 = vsel %vm411, %v418, %v422
  %v424 = vrot.slane %v352, 1
  %v425 = vsel %vm411, %v420, %v424
  %v434 = vsel %vm411, %v422, 0.0
  %v435 = vsel %vm411, %v424, 0.0
  %v436 = vmul.f32 %v414, %v362
  %v437 = vmul.f32 %v417, %v363
  %v438 = vmul.f32 %v419, %v364
  %v439 = vmul.f32 %v421, %v365
  %v440 = vmul.f32 %v423, %v366
  %v441 = vmul.f32 %v425, %v367
  %v442 = vmul.f32 %v434, %v368
  %v443 = vmul.f32 %v435, %v369
  %s444 = scalar_lea.vmem %s2, 640
  %v445 = vld [vmem:[%s444] ss:$8 sm:$0x3]
  %v447 = vlaneseq
  %v448 = vshrl.u32 %v447, 7
  %v449 = vsub.s32 0, %v448
  %v450 = vrot.slane %v445, %v449
  %v451 = vlaneseq
  %v452 = vshrl.u32 %v451, 7
  %v453 = vsub.s32 1, %v452
  %v454 = vrot.slane %v445, %v453
  %v457 = vmul.f32 %v403, %v450
  %v458 = vmul.f32 %v404, %v454
  %v459 = vmul.f32 %v405, %v450
  %v460 = vmul.f32 %v406, %v454
  %v461 = vmul.f32 %v407, %v450
  %v462 = vmul.f32 %v408, %v454
  %v463 = vmul.f32 %v409, %v450
  %v464 = vmul.f32 %v410, %v454
  %s465 = scalar_lea.vmem %s2, 643
  %v466 = vld [vmem:[%s465] ss:$8 sm:$0x3]
  %v468 = vlaneseq
  %v469 = vshrl.u32 %v468, 7
  %v470 = vsub.s32 0, %v469
  %v471 = vrot.slane %v466, %v470
  %v472 = vlaneseq
  %v473 = vshrl.u32 %v472, 7
  %v474 = vsub.s32 1, %v473
  %v475 = vrot.slane %v466, %v474
  %v478 = vmul.f32 %v332, %v471
  %v479 = vmul.f32 %v334, %v475
  %v480 = vmul.f32 %v338, %v471
  %v481 = vmul.f32 %v340, %v475
  %v482 = vmul.f32 %v344, %v471
  %v483 = vmul.f32 %v346, %v475
  %v484 = vmul.f32 %v350, %v471
  %v485 = vmul.f32 %v352, %v475
  %v486 = vadd.f32 %v457, %v478
  %v487 = vadd.f32 %v458, %v479
  %v488 = vadd.f32 %v459, %v480
  %v489 = vadd.f32 %v460, %v481
  %v490 = vadd.f32 %v461, %v482
  %v491 = vadd.f32 %v462, %v483
  %v492 = vadd.f32 %v463, %v484
  %v493 = vadd.f32 %v464, %v485
  %s494 = scalar_lea.vmem %s2, 646
  %v495 = vld [vmem:[%s494] ss:$8 sm:$0x3]
  %v497 = vlaneseq
  %v498 = vshrl.u32 %v497, 7
  %v499 = vsub.s32 0, %v498
  %v500 = vrot.slane %v495, %v499
  %v501 = vlaneseq
  %v502 = vshrl.u32 %v501, 7
  %v503 = vsub.s32 1, %v502
  %v504 = vrot.slane %v495, %v503
  %v507 = vmul.f32 %v436, %v500
  %v508 = vmul.f32 %v437, %v504
  %v509 = vmul.f32 %v438, %v500
  %v510 = vmul.f32 %v439, %v504
  %v511 = vmul.f32 %v440, %v500
  %v512 = vmul.f32 %v441, %v504
  %v513 = vmul.f32 %v442, %v500
  %v514 = vmul.f32 %v443, %v504
  %v515 = vadd.f32 %v486, %v507
  %v516 = vadd.f32 %v487, %v508
  %v517 = vadd.f32 %v488, %v509
  %v518 = vadd.f32 %v489, %v510
  %v519 = vadd.f32 %v490, %v511
  %v520 = vadd.f32 %v491, %v512
  %v521 = vadd.f32 %v492, %v513
  %v522 = vadd.f32 %v493, %v514
  %s523 = scalar_lea.vmem %s2, 641
  %v524 = vld [vmem:[%s523] ss:$8 sm:$0x3]
  %v526 = vlaneseq
  %v527 = vshrl.u32 %v526, 7
  %v528 = vsub.s32 0, %v527
  %v529 = vrot.slane %v524, %v528
  %v530 = vlaneseq
  %v531 = vshrl.u32 %v530, 7
  %v532 = vsub.s32 1, %v531
  %v533 = vrot.slane %v524, %v532
  %v536 = vmul.f32 %v403, %v529
  %v537 = vmul.f32 %v404, %v533
  %v538 = vmul.f32 %v405, %v529
  %v539 = vmul.f32 %v406, %v533
  %v540 = vmul.f32 %v407, %v529
  %v541 = vmul.f32 %v408, %v533
  %v542 = vmul.f32 %v409, %v529
  %v543 = vmul.f32 %v410, %v533
  %s544 = scalar_lea.vmem %s2, 644
  %v545 = vld [vmem:[%s544] ss:$8 sm:$0x3]
  %v547 = vlaneseq
  %v548 = vshrl.u32 %v547, 7
  %v549 = vsub.s32 0, %v548
  %v550 = vrot.slane %v545, %v549
  %v551 = vlaneseq
  %v552 = vshrl.u32 %v551, 7
  %v553 = vsub.s32 1, %v552
  %v554 = vrot.slane %v545, %v553
  %v557 = vmul.f32 %v332, %v550
  %v558 = vmul.f32 %v334, %v554
  %v559 = vmul.f32 %v338, %v550
  %v560 = vmul.f32 %v340, %v554
  %v561 = vmul.f32 %v344, %v550
  %v562 = vmul.f32 %v346, %v554
  %v563 = vmul.f32 %v350, %v550
  %v564 = vmul.f32 %v352, %v554
  %v565 = vadd.f32 %v536, %v557
  %v566 = vadd.f32 %v537, %v558
  %v567 = vadd.f32 %v538, %v559
  %v568 = vadd.f32 %v539, %v560
  %v569 = vadd.f32 %v540, %v561
  %v570 = vadd.f32 %v541, %v562
  %v571 = vadd.f32 %v542, %v563
  %v572 = vadd.f32 %v543, %v564
  %s573 = scalar_lea.vmem %s2, 647
  %v574 = vld [vmem:[%s573] ss:$8 sm:$0x3]
  %v576 = vlaneseq
  %v577 = vshrl.u32 %v576, 7
  %v578 = vsub.s32 0, %v577
  %v579 = vrot.slane %v574, %v578
  %v580 = vlaneseq
  %v581 = vshrl.u32 %v580, 7
  %v582 = vsub.s32 1, %v581
  %v583 = vrot.slane %v574, %v582
  %v586 = vmul.f32 %v436, %v579
  %v587 = vmul.f32 %v437, %v583
  %v588 = vmul.f32 %v438, %v579
  %v589 = vmul.f32 %v439, %v583
  %v590 = vmul.f32 %v440, %v579
  %v591 = vmul.f32 %v441, %v583
  %v592 = vmul.f32 %v442, %v579
  %v593 = vmul.f32 %v443, %v583
  %v594 = vadd.f32 %v565, %v586
  %v595 = vadd.f32 %v566, %v587
  %v596 = vadd.f32 %v567, %v588
  %v597 = vadd.f32 %v568, %v589
  %v598 = vadd.f32 %v569, %v590
  %v599 = vadd.f32 %v570, %v591
  %v600 = vadd.f32 %v571, %v592
  %v601 = vadd.f32 %v572, %v593
  %s602 = scalar_lea.vmem %s2, 642
  %v603 = vld [vmem:[%s602] ss:$8 sm:$0x3]
  %v605 = vlaneseq
  %v606 = vshrl.u32 %v605, 7
  %v607 = vsub.s32 0, %v606
  %v608 = vrot.slane %v603, %v607
  %v609 = vlaneseq
  %v610 = vshrl.u32 %v609, 7
  %v611 = vsub.s32 1, %v610
  %v612 = vrot.slane %v603, %v611
  %v615 = vmul.f32 %v403, %v608
  %v616 = vmul.f32 %v404, %v612
  %v617 = vmul.f32 %v405, %v608
  %v618 = vmul.f32 %v406, %v612
  %v619 = vmul.f32 %v407, %v608
  %v620 = vmul.f32 %v408, %v612
  %v621 = vmul.f32 %v409, %v608
  %v622 = vmul.f32 %v410, %v612
  %s623 = scalar_lea.vmem %s2, 645
  %v624 = vld [vmem:[%s623] ss:$8 sm:$0x3]
  %v626 = vlaneseq
  %v627 = vshrl.u32 %v626, 7
  %v628 = vsub.s32 0, %v627
  %v629 = vrot.slane %v624, %v628
  %v630 = vlaneseq
  %v631 = vshrl.u32 %v630, 7
  %v632 = vsub.s32 1, %v631
  %v633 = vrot.slane %v624, %v632
  %v636 = vmul.f32 %v332, %v629
  %v637 = vmul.f32 %v334, %v633
  %v638 = vmul.f32 %v338, %v629
  %v639 = vmul.f32 %v340, %v633
  %v640 = vmul.f32 %v344, %v629
  %v641 = vmul.f32 %v346, %v633
  %v642 = vmul.f32 %v350, %v629
  %v643 = vmul.f32 %v352, %v633
  %v644 = vadd.f32 %v615, %v636
  %v645 = vadd.f32 %v616, %v637
  %v646 = vadd.f32 %v617, %v638
  %v647 = vadd.f32 %v618, %v639
  %v648 = vadd.f32 %v619, %v640
  %v649 = vadd.f32 %v620, %v641
  %v650 = vadd.f32 %v621, %v642
  %v651 = vadd.f32 %v622, %v643
  %s652 = scalar_lea.vmem %s2, 656
  %v653 = vld [vmem:[%s652] ss:$8 sm:$0x3]
  %v655 = vlaneseq
  %v656 = vshrl.u32 %v655, 7
  %v657 = vsub.s32 0, %v656
  %v658 = vrot.slane %v653, %v657
  %v659 = vlaneseq
  %v660 = vshrl.u32 %v659, 7
  %v661 = vsub.s32 1, %v660
  %v662 = vrot.slane %v653, %v661
  %v665 = vmul.f32 %v436, %v658
  %v666 = vmul.f32 %v437, %v662
  %v667 = vmul.f32 %v438, %v658
  %v668 = vmul.f32 %v439, %v662
  %v669 = vmul.f32 %v440, %v658
  %v670 = vmul.f32 %v441, %v662
  %v671 = vmul.f32 %v442, %v658
  %v672 = vmul.f32 %v443, %v662
  %v673 = vadd.f32 %v644, %v665
  %v674 = vadd.f32 %v645, %v666
  %v675 = vadd.f32 %v646, %v667
  %v676 = vadd.f32 %v647, %v668
  %v677 = vadd.f32 %v648, %v669
  %v678 = vadd.f32 %v649, %v670
  %v679 = vadd.f32 %v650, %v671
  %v680 = vadd.f32 %v651, %v672
  %689 = vrot.lane.b32.xlu0 %v515, 1
  %v690 = vpop.permute.xlu0 %689
  %691 = vrot.lane.b32.xlu0 %v516, 1
  %v692 = vpop.permute.xlu0 %691
  %693 = vrot.lane.b32.xlu0 %v517, 1
  %v694 = vpop.permute.xlu0 %693
  %695 = vrot.lane.b32.xlu0 %v518, 1
  %v696 = vpop.permute.xlu0 %695
  %697 = vrot.lane.b32.xlu0 %v519, 1
  %v698 = vpop.permute.xlu0 %697
  %699 = vrot.lane.b32.xlu0 %v520, 1
  %v700 = vpop.permute.xlu0 %699
  %701 = vrot.lane.b32.xlu0 %v521, 1
  %v702 = vpop.permute.xlu0 %701
  %703 = vrot.lane.b32.xlu0 %v522, 1
  %v704 = vpop.permute.xlu0 %703
  %vm705 = vcmask 7168
  %v706 = vsel %vm705, %v690, %v692
  %v707 = vsel %vm705, %v694, %v696
  %v708 = vsel %vm705, %v698, %v700
  %v709 = vsel %vm705, %v702, %v704
  %v718 = vsel %vm705, 0.0, %v690
  %v719 = vsel %vm705, 0.0, %v694
  %v720 = vsel %vm705, 0.0, %v698
  %v721 = vsel %vm705, 0.0, %v702
  %v722 = vadd.f32 %v594, %v718
  %v723 = vadd.f32 %v595, %v706
  %v724 = vadd.f32 %v596, %v719
  %v725 = vadd.f32 %v597, %v707
  %v726 = vadd.f32 %v598, %v720
  %v727 = vadd.f32 %v599, %v708
  %v728 = vadd.f32 %v600, %v721
  %v729 = vadd.f32 %v601, %v709
  %738 = vrot.lane.b32.xlu0 %v673, 127
  %v739 = vpop.permute.xlu0 %738
  %740 = vrot.lane.b32.xlu0 %v674, 127
  %v741 = vpop.permute.xlu0 %740
  %742 = vrot.lane.b32.xlu0 %v675, 127
  %v743 = vpop.permute.xlu0 %742
  %744 = vrot.lane.b32.xlu0 %v676, 127
  %v745 = vpop.permute.xlu0 %744
  %746 = vrot.lane.b32.xlu0 %v677, 127
  %v747 = vpop.permute.xlu0 %746
  %748 = vrot.lane.b32.xlu0 %v678, 127
  %v749 = vpop.permute.xlu0 %748
  %750 = vrot.lane.b32.xlu0 %v679, 127
  %v751 = vpop.permute.xlu0 %750
  %752 = vrot.lane.b32.xlu0 %v680, 127
  %v753 = vpop.permute.xlu0 %752
  %vm754 = vcmask 1039360
  %v755 = vsel %vm754, %v739, %v741
  %v756 = vsel %vm754, %v743, %v745
  %v757 = vsel %vm754, %v747, %v749
  %v758 = vsel %vm754, %v751, %v753
  %v767 = vsel %vm754, %v741, 0.0
  %v768 = vsel %vm754, %v745, 0.0
  %v769 = vsel %vm754, %v749, 0.0
  %v770 = vsel %vm754, %v753, 0.0
  %v771 = vadd.f32 %v722, %v755
  %v772 = vadd.f32 %v723, %v767
  %v773 = vadd.f32 %v724, %v756
  %v774 = vadd.f32 %v725, %v768
  %v775 = vadd.f32 %v726, %v757
  %v776 = vadd.f32 %v727, %v769
  %v777 = vadd.f32 %v728, %v758
  %v778 = vadd.f32 %v729, %v770
  %s779 = scalar_lea.vmem %s2, 657
  %v780 = vld [vmem:[%s779] ss:$8 sm:$0x3]
  %v782 = vlaneseq
  %v783 = vshrl.u32 %v782, 7
  %v784 = vsub.s32 0, %v783
  %v785 = vrot.slane %v780, %v784
  %v786 = vlaneseq
  %v787 = vshrl.u32 %v786, 7
  %v788 = vsub.s32 1, %v787
  %v789 = vrot.slane %v780, %v788
  %v792 = vadd.f32 %v771, %v785
  %v793 = vadd.f32 %v772, %v789
  %v794 = vadd.f32 %v773, %v785
  %v795 = vadd.f32 %v774, %v789
  %v796 = vadd.f32 %v775, %v785
  %v797 = vadd.f32 %v776, %v789
  %v798 = vadd.f32 %v777, %v785
  %v799 = vadd.f32 %v778, %v789
  %804 = vrot.lane.b32.xlu0 %v793, 64
  %v805 = vpop.permute.xlu0 %804
  %806 = vrot.lane.b32.xlu0 %v795, 64
  %v807 = vpop.permute.xlu0 %806
  %808 = vrot.lane.b32.xlu0 %v797, 64
  %v809 = vpop.permute.xlu0 %808
  %810 = vrot.lane.b32.xlu0 %v799, 64
  %v811 = vpop.permute.xlu0 %810
  %v816 = vmul.f32 %v792, %v805
  %v817 = vmul.f32 %v794, %v807
  %v818 = vmul.f32 %v796, %v809
  %v819 = vmul.f32 %v798, %v811
  %824 = vrot.lane.b32.xlu0 %v792, 64
  %v825 = vpop.permute.xlu0 %824
  %826 = vrot.lane.b32.xlu0 %v794, 64
  %v827 = vpop.permute.xlu0 %826
  %828 = vrot.lane.b32.xlu0 %v796, 64
  %v829 = vpop.permute.xlu0 %828
  %830 = vrot.lane.b32.xlu0 %v798, 64
  %v831 = vpop.permute.xlu0 %830
  %v836 = vmul.f32 %v793, %v825
  %v837 = vmul.f32 %v795, %v827
  %v838 = vmul.f32 %v797, %v829
  %v839 = vmul.f32 %v799, %v831
  %844 = vrot.lane.b32.xlu0 %v836, 64
  %v845 = vpop.permute.xlu0 %844
  %846 = vrot.lane.b32.xlu0 %v837, 64
  %v847 = vpop.permute.xlu0 %846
  %848 = vrot.lane.b32.xlu0 %v838, 64
  %v849 = vpop.permute.xlu0 %848
  %850 = vrot.lane.b32.xlu0 %v839, 64
  %v851 = vpop.permute.xlu0 %850
  %vm856 = vcmask 523264
  %v857 = vsel %vm856, %v816, %v845
  %v858 = vsel %vm856, %v817, %v847
  %v859 = vsel %vm856, %v818, %v849
  %v860 = vsel %vm856, %v819, %v851
  %v861 = vld [vmem:[%s1 + $0x200] sm:$0xff]
  %v862 = vld [vmem:[%s1 + $0x208] sm:$0xff]
  %v863 = vld [vmem:[%s1 + $0x210] sm:$0xff]
  %v864 = vld [vmem:[%s1 + $0x218] sm:$0xff]
  %vm865 = vcmask 261120
  %v867 = vsel %vm865, %v861, 0
  %v870 = vsel %vm865, %v862, 0
  %v873 = vsel %vm865, %v863, 0
  %v876 = vsel %vm865, %v864, 0
  %878 = vmatprep.subr.mxu0 0.0
  %879 = vmatpush1.msra.mxu0 %v857
  %880 = vmatprep.subr.mxu0 0.0
  %881 = vmatpush1.msra.mxu0 %v858
  %882 = vmatprep.subr.mxu0 0.0
  %883 = vmatpush1.msra.mxu0 %v859
  %884 = vmatprep.subr.mxu0 0.0
  %885 = vmatpush1.msra.mxu0 %v860
  %886 = vmatprep.subr.mxu0 0.0
  %887 = vmatpush1.msra.mxu0 0.0
  %888 = vmatprep.subr.mxu0 0.0
  %889 = vmatpush1.msra.mxu0 0.0
  %890 = vmatprep.subr.mxu0 0.0
  %891 = vmatpush1.msra.mxu0 0.0
  %892 = vmatprep.subr.mxu0 0.0
  %893 = vmatpush1.msra.mxu0 0.0
  %894 = vmatprep.subr.mxu0 0.0
  %895 = vmatpush1.msra.mxu0 0.0
  %896 = vmatprep.subr.mxu0 0.0
  %897 = vmatpush1.msra.mxu0 0.0
  %898 = vmatprep.subr.mxu0 0.0
  %899 = vmatpush1.msra.mxu0 0.0
  %900 = vmatprep.subr.mxu0 0.0
  %901 = vmatpush1.msra.mxu0 0.0
  %902 = vmatprep.subr.mxu0 0.0
  %903 = vmatpush1.msra.mxu0 0.0
  %904 = vmatprep.subr.mxu0 0.0
  %905 = vmatpush1.msra.mxu0 0.0
  %906 = vmatprep.subr.mxu0 0.0
  %907 = vmatpush1.msra.mxu0 0.0
  %908 = vmatprep.subr.mxu0 0.0
  %909 = vmatpush1.msra.mxu0 0.0
  %910 = vmatprep.subr.mxu0 0.0
  %911 = vmatpush1.msra.mxu0 0.0
  %912 = vmatprep.subr.mxu0 0.0
  %913 = vmatpush1.msra.mxu0 0.0
  %914 = vmatprep.subr.mxu0 0.0
  %915 = vmatpush1.msra.mxu0 0.0
  %916 = vmatprep.subr.mxu0 0.0
  %917 = vmatpush1.msra.mxu0 0.0
  %918 = vmatprep.subr.mxu0 0.0
  %919 = vmatpush1.msra.mxu0 0.0
  %920 = vmatprep.subr.mxu0 0.0
  %921 = vmatpush1.msra.mxu0 0.0
  %922 = vmatprep.subr.mxu0 0.0
  %923 = vmatpush1.msra.mxu0 0.0
  %924 = vmatprep.subr.mxu0 0.0
  %925 = vmatpush1.msra.mxu0 0.0
  %926 = vmatprep.subr.mxu0 0.0
  %927 = vmatpush1.msra.mxu0 0.0
  %928 = vmatprep.subr.mxu0 0.0
  %929 = vmatpush1.msra.mxu0 0.0
  %930 = vmatprep.subr.mxu0 0.0
  %931 = vmatpush1.msra.mxu0 0.0
  %932 = vmatprep.subr.mxu0 0.0
  %933 = vmatpush1.msra.mxu0 0.0
  %934 = vmatprep.subr.mxu0 0.0
  %935 = vmatpush1.msra.mxu0 0.0
  %936 = vmatprep.subr.mxu0 0.0
  %937 = vmatpush1.msra.mxu0 0.0
  %938 = vmatprep.subr.mxu0 0.0
  %939 = vmatpush1.msra.mxu0 0.0
  %940 = vmatprep.subr.mxu0 0.0
  %941 = vmatpush1.msra.mxu0 0.0
  %942 = vmatprep.mubr.f32.mxu0 0.0
  %943 = vmatmul.mubr.f32.gmra.mrb[0].mxu0 %v867
  %v944 = vpop.f32.mrb[0].mxu0
  %v945 = vadd.f32 0.0, %v944
  %v946 = vpop.f32.mrb[0].mxu0
  %947 = vmatprep.mubr.f32.mxu0 0.0
  %948 = vmatmul.mubr.f32.gmra.mrb[0].mxu0 %v870
  %v949 = vpop.f32.mrb[0].mxu0
  %v950 = vadd.f32 0.0, %v949
  %v951 = vpop.f32.mrb[0].mxu0
  %952 = vmatprep.mubr.f32.mxu0 0.0
  %953 = vmatmul.mubr.f32.gmra.mrb[0].mxu0 %v873
  %v954 = vpop.f32.mrb[0].mxu0
  %v955 = vadd.f32 0.0, %v954
  %v956 = vpop.f32.mrb[0].mxu0
  %957 = vmatprep.mubr.f32.mxu0 0.0
  %958 = vmatmul.mubr.f32.gmra.mrb[0].mxu0 %v876
  %v959 = vpop.f32.mrb[0].mxu0
  %v960 = vadd.f32 0.0, %v959
  %v961 = vpop.f32.mrb[0].mxu0
  %962 = vdwg.mxu0
  %v963 = vld [vmem:[%s1 + $0x180] sm:$0xff]
  %v964 = vld [vmem:[%s1 + $0x188] sm:$0xff]
  %v965 = vld [vmem:[%s1 + $0x190] sm:$0xff]
  %v966 = vld [vmem:[%s1 + $0x198] sm:$0xff]
  %v967 = vld [vmem:[%s1 + $0x1a0] sm:$0xff]
  %v968 = vld [vmem:[%s1 + $0x1a8] sm:$0xff]
  %v969 = vld [vmem:[%s1 + $0x1b0] sm:$0xff]
  %v970 = vld [vmem:[%s1 + $0x1b8] sm:$0xff]
  %v971 = vld [vmem:[%s1 + $0x1c0] sm:$0xff]
  %v972 = vld [vmem:[%s1 + $0x1c8] sm:$0xff]
  %v973 = vld [vmem:[%s1 + $0x1d0] sm:$0xff]
  %v974 = vld [vmem:[%s1 + $0x1d8] sm:$0xff]
  %v975 = vld [vmem:[%s1 + $0x1e0] sm:$0xff]
  %v976 = vld [vmem:[%s1 + $0x1e8] sm:$0xff]
  %v977 = vld [vmem:[%s1 + $0x1f0] sm:$0xff]
  %v978 = vld [vmem:[%s1 + $0x1f8] sm:$0xff]
  %v979 = vld [vmem:[%s1 + $0x222] sm:$0x1]
  %v980 = vlaneseq
  %v981 = vshrl.u32 %v980, 7
  %v982 = vsub.s32 0, %v981
  %v983 = vrot.slane %v979, %v982
  %984 = vmatprep.subr.mxu0 0.0
  %985 = vmatpush1.msra.mxu0 %v963
  %986 = vmatprep.subr.mxu0 0.0
  %987 = vmatpush1.msra.mxu0 %v964
  %988 = vmatprep.subr.mxu0 0.0
  %989 = vmatpush1.msra.mxu0 %v965
  %990 = vmatprep.subr.mxu0 0.0
  %991 = vmatpush1.msra.mxu0 %v966
  %992 = vmatprep.subr.mxu0 0.0
  %993 = vmatpush1.msra.mxu0 %v967
  %994 = vmatprep.subr.mxu0 0.0
  %995 = vmatpush1.msra.mxu0 %v968
  %996 = vmatprep.subr.mxu0 0.0
  %997 = vmatpush1.msra.mxu0 %v969
  %998 = vmatprep.subr.mxu0 0.0
  %999 = vmatpush1.msra.mxu0 %v970
  %1000 = vmatprep.subr.mxu0 0.0
  %1001 = vmatpush1.msra.mxu0 %v971
  %1002 = vmatprep.subr.mxu0 0.0
  %1003 = vmatpush1.msra.mxu0 %v972
  %1004 = vmatprep.subr.mxu0 0.0
  %1005 = vmatpush1.msra.mxu0 %v973
  %1006 = vmatprep.subr.mxu0 0.0
  %1007 = vmatpush1.msra.mxu0 %v974
  %1008 = vmatprep.subr.mxu0 0.0
  %1009 = vmatpush1.msra.mxu0 %v975
  %1010 = vmatprep.subr.mxu0 0.0
  %1011 = vmatpush1.msra.mxu0 %v976
  %1012 = vmatprep.subr.mxu0 0.0
  %1013 = vmatpush1.msra.mxu0 %v977
  %1014 = vmatprep.subr.mxu0 0.0
  %1015 = vmatpush1.msra.mxu0 %v978
  %1016 = vmatprep.subr.mxu0 0.0
  %1017 = vmatpush1.msra.mxu0 0.0
  %1018 = vmatprep.subr.mxu0 0.0
  %1019 = vmatpush1.msra.mxu0 0.0
  %1020 = vmatprep.subr.mxu0 0.0
  %1021 = vmatpush1.msra.mxu0 0.0
  %1022 = vmatprep.subr.mxu0 0.0
  %1023 = vmatpush1.msra.mxu0 0.0
  %1024 = vmatprep.subr.mxu0 0.0
  %1025 = vmatpush1.msra.mxu0 0.0
  %1026 = vmatprep.subr.mxu0 0.0
  %1027 = vmatpush1.msra.mxu0 0.0
  %1028 = vmatprep.subr.mxu0 0.0
  %1029 = vmatpush1.msra.mxu0 0.0
  %1030 = vmatprep.subr.mxu0 0.0
  %1031 = vmatpush1.msra.mxu0 0.0
  %1032 = vmatprep.subr.mxu0 0.0
  %1033 = vmatpush1.msra.mxu0 0.0
  %1034 = vmatprep.subr.mxu0 0.0
  %1035 = vmatpush1.msra.mxu0 0.0
  %1036 = vmatprep.subr.mxu0 0.0
  %1037 = vmatpush1.msra.mxu0 0.0
  %1038 = vmatprep.subr.mxu0 0.0
  %1039 = vmatpush1.msra.mxu0 0.0
  %1040 = vmatprep.subr.mxu0 0.0
  %1041 = vmatpush1.msra.mxu0 0.0
  %1042 = vmatprep.subr.mxu0 0.0
  %1043 = vmatpush1.msra.mxu0 0.0
  %1044 = vmatprep.subr.mxu0 0.0
  %1045 = vmatpush1.msra.mxu0 0.0
  %1046 = vmatprep.subr.mxu0 0.0
  %1047 = vmatpush1.msra.mxu0 0.0
  %1048 = vmatprep.mubr.f32.mxu0 0.0
  %1049 = vmatmul.mubr.f32.gmra.mrb[0].mxu0 %v945
  %v1050 = vpop.f32.mrb[0].mxu0
  %v1051 = vadd.f32 %v983, %v1050
  %v1052 = vpop.f32.mrb[0].mxu0
  %1053 = vmatprep.mubr.f32.mxu0 0.0
  %1054 = vmatmul.mubr.f32.gmra.mrb[0].mxu0 %v950
  %v1055 = vpop.f32.mrb[0].mxu0
  %v1056 = vadd.f32 %v983, %v1055
  %v1057 = vpop.f32.mrb[0].mxu0
  %1058 = vmatprep.mubr.f32.mxu0 0.0
  %1059 = vmatmul.mubr.f32.gmra.mrb[0].mxu0 %v955
  %v1060 = vpop.f32.mrb[0].mxu0
  %v1061 = vadd.f32 %v983, %v1060
  %v1062 = vpop.f32.mrb[0].mxu0
  %1063 = vmatprep.mubr.f32.mxu0 0.0
  %1064 = vmatmul.mubr.f32.gmra.mrb[0].mxu0 %v960
  %v1065 = vpop.f32.mrb[0].mxu0
  %v1066 = vadd.f32 %v983, %v1065
  %v1067 = vpop.f32.mrb[0].mxu0
  %1068 = vdwg.mxu0
  %v1069 = vmul.f32 %v857, %v1051
  %v1070 = vmul.f32 %v858, %v1056
  %v1071 = vmul.f32 %v859, %v1061
  %v1072 = vmul.f32 %v860, %v1066
  %v1073 = vld [vmem:[%s1 + $0x80] sm:$0xff]
  %v1074 = vld [vmem:[%s1 + $0x88] sm:$0xff]
  %v1075 = vld [vmem:[%s1 + $0x90] sm:$0xff]
  %v1076 = vld [vmem:[%s1 + $0x98] sm:$0xff]
  %v1077 = vld [vmem:[%s1 + $0xa0] sm:$0xff]
  %v1078 = vld [vmem:[%s1 + $0xa8] sm:$0xff]
  %v1079 = vld [vmem:[%s1 + $0xb0] sm:$0xff]
  %v1080 = vld [vmem:[%s1 + $0xb8] sm:$0xff]
  %v1081 = vld [vmem:[%s1 + $0xc0] sm:$0xff]
  %v1082 = vld [vmem:[%s1 + $0xc8] sm:$0xff]
  %v1083 = vld [vmem:[%s1 + $0xd0] sm:$0xff]
  %v1084 = vld [vmem:[%s1 + $0xd8] sm:$0xff]
  %v1085 = vld [vmem:[%s1 + $0xe0] sm:$0xff]
  %v1086 = vld [vmem:[%s1 + $0xe8] sm:$0xff]
  %v1087 = vld [vmem:[%s1 + $0xf0] sm:$0xff]
  %v1088 = vld [vmem:[%s1 + $0xf8] sm:$0xff]
  %v1089 = vld [vmem:[%s1 + $0x220] sm:$0x1]
  %v1090 = vlaneseq
  %v1091 = vshrl.u32 %v1090, 7
  %v1092 = vsub.s32 0, %v1091
  %v1093 = vrot.slane %v1089, %v1092
  %1094 = vmatprep.subr.mxu0 0.0
  %1095 = vmatpush1.msra.mxu0 %v1073
  %1096 = vmatprep.subr.mxu0 0.0
  %1097 = vmatpush1.msra.mxu0 %v1074
  %1098 = vmatprep.subr.mxu0 0.0
  %1099 = vmatpush1.msra.mxu0 %v1075
  %1100 = vmatprep.subr.mxu0 0.0
  %1101 = vmatpush1.msra.mxu0 %v1076
  %1102 = vmatprep.subr.mxu0 0.0
  %1103 = vmatpush1.msra.mxu0 %v1077
  %1104 = vmatprep.subr.mxu0 0.0
  %1105 = vmatpush1.msra.mxu0 %v1078
  %1106 = vmatprep.subr.mxu0 0.0
  %1107 = vmatpush1.msra.mxu0 %v1079
  %1108 = vmatprep.subr.mxu0 0.0
  %1109 = vmatpush1.msra.mxu0 %v1080
  %1110 = vmatprep.subr.mxu0 0.0
  %1111 = vmatpush1.msra.mxu0 %v1081
  %1112 = vmatprep.subr.mxu0 0.0
  %1113 = vmatpush1.msra.mxu0 %v1082
  %1114 = vmatprep.subr.mxu0 0.0
  %1115 = vmatpush1.msra.mxu0 %v1083
  %1116 = vmatprep.subr.mxu0 0.0
  %1117 = vmatpush1.msra.mxu0 %v1084
  %1118 = vmatprep.subr.mxu0 0.0
  %1119 = vmatpush1.msra.mxu0 %v1085
  %1120 = vmatprep.subr.mxu0 0.0
  %1121 = vmatpush1.msra.mxu0 %v1086
  %1122 = vmatprep.subr.mxu0 0.0
  %1123 = vmatpush1.msra.mxu0 %v1087
  %1124 = vmatprep.subr.mxu0 0.0
  %1125 = vmatpush1.msra.mxu0 %v1088
  %1126 = vmatprep.subr.mxu0 0.0
  %1127 = vmatpush1.msra.mxu0 0.0
  %1128 = vmatprep.subr.mxu0 0.0
  %1129 = vmatpush1.msra.mxu0 0.0
  %1130 = vmatprep.subr.mxu0 0.0
  %1131 = vmatpush1.msra.mxu0 0.0
  %1132 = vmatprep.subr.mxu0 0.0
  %1133 = vmatpush1.msra.mxu0 0.0
  %1134 = vmatprep.subr.mxu0 0.0
  %1135 = vmatpush1.msra.mxu0 0.0
  %1136 = vmatprep.subr.mxu0 0.0
  %1137 = vmatpush1.msra.mxu0 0.0
  %1138 = vmatprep.subr.mxu0 0.0
  %1139 = vmatpush1.msra.mxu0 0.0
  %1140 = vmatprep.subr.mxu0 0.0
  %1141 = vmatpush1.msra.mxu0 0.0
  %1142 = vmatprep.subr.mxu0 0.0
  %1143 = vmatpush1.msra.mxu0 0.0
  %1144 = vmatprep.subr.mxu0 0.0
  %1145 = vmatpush1.msra.mxu0 0.0
  %1146 = vmatprep.subr.mxu0 0.0
  %1147 = vmatpush1.msra.mxu0 0.0
  %1148 = vmatprep.subr.mxu0 0.0
  %1149 = vmatpush1.msra.mxu0 0.0
  %1150 = vmatprep.subr.mxu0 0.0
  %1151 = vmatpush1.msra.mxu0 0.0
  %1152 = vmatprep.subr.mxu0 0.0
  %1153 = vmatpush1.msra.mxu0 0.0
  %1154 = vmatprep.subr.mxu0 0.0
  %1155 = vmatpush1.msra.mxu0 0.0
  %1156 = vmatprep.subr.mxu0 0.0
  %1157 = vmatpush1.msra.mxu0 0.0
  %1158 = vmatprep.mubr.f32.mxu0 0.0
  %1159 = vmatmul.mubr.f32.gmra.mrb[0].mxu0 %v1069
  %v1160 = vpop.f32.mrb[0].mxu0
  %v1161 = vadd.f32 %v1093, %v1160
  %v1162 = vpop.f32.mrb[0].mxu0
  %1163 = vmatprep.mubr.f32.mxu0 0.0
  %1164 = vmatmul.mubr.f32.gmra.mrb[0].mxu0 %v1070
  %v1165 = vpop.f32.mrb[0].mxu0
  %v1166 = vadd.f32 %v1093, %v1165
  %v1167 = vpop.f32.mrb[0].mxu0
  %1168 = vmatprep.mubr.f32.mxu0 0.0
  %1169 = vmatmul.mubr.f32.gmra.mrb[0].mxu0 %v1071
  %v1170 = vpop.f32.mrb[0].mxu0
  %v1171 = vadd.f32 %v1093, %v1170
  %v1172 = vpop.f32.mrb[0].mxu0
  %1173 = vmatprep.mubr.f32.mxu0 0.0
  %1174 = vmatmul.mubr.f32.gmra.mrb[0].mxu0 %v1072
  %v1175 = vpop.f32.mrb[0].mxu0
  %v1176 = vadd.f32 %v1093, %v1175
  %v1177 = vpop.f32.mrb[0].mxu0
  %1178 = vdwg.mxu0
  %v1179 = vld [vmem:[%s1 + $0x223] sm:$0x1]
  %v1180 = vlaneseq
  %v1181 = vshrl.u32 %v1180, 7
  %v1182 = vsub.s32 0, %v1181
  %v1183 = vrot.slane %v1179, %v1182
  %v1184 = vmul.f32 %v1161, %v1183
  %v1185 = vmul.f32 %v1166, %v1183
  %v1186 = vmul.f32 %v1171, %v1183
  %v1187 = vmul.f32 %v1176, %v1183
  %v1188 = vadd.f32 %v14, %v1184
  %v1189 = vadd.f32 %v15, %v1185
  %v1190 = vadd.f32 %v16, %v1186
  %v1191 = vadd.f32 %v17, %v1187
  %1192 = vmatprep.subr.mxu0 0.0
  %1193 = vmatpush1.msra.mxu0 %v18
  %1194 = vmatprep.subr.mxu0 0.0
  %1195 = vmatpush1.msra.mxu0 %v19
  %1196 = vmatprep.subr.mxu0 0.0
  %1197 = vmatpush1.msra.mxu0 %v20
  %1198 = vmatprep.subr.mxu0 0.0
  %1199 = vmatpush1.msra.mxu0 %v21
  %1200 = vmatprep.subr.mxu0 0.0
  %1201 = vmatpush1.msra.mxu0 %v22
  %1202 = vmatprep.subr.mxu0 0.0
  %1203 = vmatpush1.msra.mxu0 %v23
  %1204 = vmatprep.subr.mxu0 0.0
  %1205 = vmatpush1.msra.mxu0 %v24
  %1206 = vmatprep.subr.mxu0 0.0
  %1207 = vmatpush1.msra.mxu0 %v25
  %1208 = vmatprep.subr.mxu0 0.0
  %1209 = vmatpush1.msra.mxu0 %v26
  %1210 = vmatprep.subr.mxu0 0.0
  %1211 = vmatpush1.msra.mxu0 %v27
  %1212 = vmatprep.subr.mxu0 0.0
  %1213 = vmatpush1.msra.mxu0 %v28
  %1214 = vmatprep.subr.mxu0 0.0
  %1215 = vmatpush1.msra.mxu0 %v29
  %1216 = vmatprep.subr.mxu0 0.0
  %1217 = vmatpush1.msra.mxu0 %v30
  %1218 = vmatprep.subr.mxu0 0.0
  %1219 = vmatpush1.msra.mxu0 %v31
  %1220 = vmatprep.subr.mxu0 0.0
  %1221 = vmatpush1.msra.mxu0 %v32
  %1222 = vmatprep.subr.mxu0 0.0
  %1223 = vmatpush1.msra.mxu0 %v33
  %1224 = vmatprep.subr.mxu0 0.0
  %1225 = vmatpush1.msra.mxu0 0.0
  %1226 = vmatprep.subr.mxu0 0.0
  %1227 = vmatpush1.msra.mxu0 0.0
  %1228 = vmatprep.subr.mxu0 0.0
  %1229 = vmatpush1.msra.mxu0 0.0
  %1230 = vmatprep.subr.mxu0 0.0
  %1231 = vmatpush1.msra.mxu0 0.0
  %1232 = vmatprep.subr.mxu0 0.0
  %1233 = vmatpush1.msra.mxu0 0.0
  %1234 = vmatprep.subr.mxu0 0.0
  %1235 = vmatpush1.msra.mxu0 0.0
  %1236 = vmatprep.subr.mxu0 0.0
  %1237 = vmatpush1.msra.mxu0 0.0
  %1238 = vmatprep.subr.mxu0 0.0
  %1239 = vmatpush1.msra.mxu0 0.0
  %1240 = vmatprep.subr.mxu0 0.0
  %1241 = vmatpush1.msra.mxu0 0.0
  %1242 = vmatprep.subr.mxu0 0.0
  %1243 = vmatpush1.msra.mxu0 0.0
  %1244 = vmatprep.subr.mxu0 0.0
  %1245 = vmatpush1.msra.mxu0 0.0
  %1246 = vmatprep.subr.mxu0 0.0
  %1247 = vmatpush1.msra.mxu0 0.0
  %1248 = vmatprep.subr.mxu0 0.0
  %1249 = vmatpush1.msra.mxu0 0.0
  %1250 = vmatprep.subr.mxu0 0.0
  %1251 = vmatpush1.msra.mxu0 0.0
  %1252 = vmatprep.subr.mxu0 0.0
  %1253 = vmatpush1.msra.mxu0 0.0
  %1254 = vmatprep.subr.mxu0 0.0
  %1255 = vmatpush1.msra.mxu0 0.0
  %1256 = vmatprep.mubr.f32.mxu0 0.0
  %1257 = vmatmul.mubr.f32.gmra.mrb[0].mxu0 %v1188
  %v1258 = vpop.f32.mrb[0].mxu0
  %v1259 = vadd.f32 0.0, %v1258
  %v1260 = vpop.f32.mrb[0].mxu0
  %1261 = vmatprep.mubr.f32.mxu0 0.0
  %1262 = vmatmul.mubr.f32.gmra.mrb[0].mxu0 %v1189
  %v1263 = vpop.f32.mrb[0].mxu0
  %v1264 = vadd.f32 0.0, %v1263
  %v1265 = vpop.f32.mrb[0].mxu0
  %1266 = vmatprep.mubr.f32.mxu0 0.0
  %1267 = vmatmul.mubr.f32.gmra.mrb[0].mxu0 %v1190
  %v1268 = vpop.f32.mrb[0].mxu0
  %v1269 = vadd.f32 0.0, %v1268
  %v1270 = vpop.f32.mrb[0].mxu0
  %1271 = vmatprep.mubr.f32.mxu0 0.0
  %1272 = vmatmul.mubr.f32.gmra.mrb[0].mxu0 %v1191
  %v1273 = vpop.f32.mrb[0].mxu0
  %v1274 = vadd.f32 0.0, %v1273
  %v1275 = vpop.f32.mrb[0].mxu0
  %1276 = vdwg.mxu0
  %v1277 = vsub.f32 %v1188, %v1259
  %v1278 = vsub.f32 %v1189, %v1264
  %v1279 = vsub.f32 %v1190, %v1269
  %v1280 = vsub.f32 %v1191, %v1274
  %v1281 = vmul.f32 %v1277, %v1277
  %v1282 = vmul.f32 %v1278, %v1278
  %v1283 = vmul.f32 %v1279, %v1279
  %v1284 = vmul.f32 %v1280, %v1280
  %1285 = vmatprep.subr.mxu0 0.0
  %1286 = vmatpush1.msra.mxu0 %v18
  %1287 = vmatprep.subr.mxu0 0.0
  %1288 = vmatpush1.msra.mxu0 %v19
  %1289 = vmatprep.subr.mxu0 0.0
  %1290 = vmatpush1.msra.mxu0 %v20
  %1291 = vmatprep.subr.mxu0 0.0
  %1292 = vmatpush1.msra.mxu0 %v21
  %1293 = vmatprep.subr.mxu0 0.0
  %1294 = vmatpush1.msra.mxu0 %v22
  %1295 = vmatprep.subr.mxu0 0.0
  %1296 = vmatpush1.msra.mxu0 %v23
  %1297 = vmatprep.subr.mxu0 0.0
  %1298 = vmatpush1.msra.mxu0 %v24
  %1299 = vmatprep.subr.mxu0 0.0
  %1300 = vmatpush1.msra.mxu0 %v25
  %1301 = vmatprep.subr.mxu0 0.0
  %1302 = vmatpush1.msra.mxu0 %v26
  %1303 = vmatprep.subr.mxu0 0.0
  %1304 = vmatpush1.msra.mxu0 %v27
  %1305 = vmatprep.subr.mxu0 0.0
  %1306 = vmatpush1.msra.mxu0 %v28
  %1307 = vmatprep.subr.mxu0 0.0
  %1308 = vmatpush1.msra.mxu0 %v29
  %1309 = vmatprep.subr.mxu0 0.0
  %1310 = vmatpush1.msra.mxu0 %v30
  %1311 = vmatprep.subr.mxu0 0.0
  %1312 = vmatpush1.msra.mxu0 %v31
  %1313 = vmatprep.subr.mxu0 0.0
  %1314 = vmatpush1.msra.mxu0 %v32
  %1315 = vmatprep.subr.mxu0 0.0
  %1316 = vmatpush1.msra.mxu0 %v33
  %1317 = vmatprep.subr.mxu0 0.0
  %1318 = vmatpush1.msra.mxu0 0.0
  %1319 = vmatprep.subr.mxu0 0.0
  %1320 = vmatpush1.msra.mxu0 0.0
  %1321 = vmatprep.subr.mxu0 0.0
  %1322 = vmatpush1.msra.mxu0 0.0
  %1323 = vmatprep.subr.mxu0 0.0
  %1324 = vmatpush1.msra.mxu0 0.0
  %1325 = vmatprep.subr.mxu0 0.0
  %1326 = vmatpush1.msra.mxu0 0.0
  %1327 = vmatprep.subr.mxu0 0.0
  %1328 = vmatpush1.msra.mxu0 0.0
  %1329 = vmatprep.subr.mxu0 0.0
  %1330 = vmatpush1.msra.mxu0 0.0
  %1331 = vmatprep.subr.mxu0 0.0
  %1332 = vmatpush1.msra.mxu0 0.0
  %1333 = vmatprep.subr.mxu0 0.0
  %1334 = vmatpush1.msra.mxu0 0.0
  %1335 = vmatprep.subr.mxu0 0.0
  %1336 = vmatpush1.msra.mxu0 0.0
  %1337 = vmatprep.subr.mxu0 0.0
  %1338 = vmatpush1.msra.mxu0 0.0
  %1339 = vmatprep.subr.mxu0 0.0
  %1340 = vmatpush1.msra.mxu0 0.0
  %1341 = vmatprep.subr.mxu0 0.0
  %1342 = vmatpush1.msra.mxu0 0.0
  %1343 = vmatprep.subr.mxu0 0.0
  %1344 = vmatpush1.msra.mxu0 0.0
  %1345 = vmatprep.subr.mxu0 0.0
  %1346 = vmatpush1.msra.mxu0 0.0
  %1347 = vmatprep.subr.mxu0 0.0
  %1348 = vmatpush1.msra.mxu0 0.0
  %1349 = vmatprep.mubr.f32.mxu0 0.0
  %1350 = vmatmul.mubr.f32.gmra.mrb[0].mxu0 %v1281
  %v1351 = vpop.f32.mrb[0].mxu0
  %v1352 = vadd.f32 1e-06, %v1351
  %v1353 = vpop.f32.mrb[0].mxu0
  %1354 = vmatprep.mubr.f32.mxu0 0.0
  %1355 = vmatmul.mubr.f32.gmra.mrb[0].mxu0 %v1282
  %v1356 = vpop.f32.mrb[0].mxu0
  %v1357 = vadd.f32 1e-06, %v1356
  %v1358 = vpop.f32.mrb[0].mxu0
  %1359 = vmatprep.mubr.f32.mxu0 0.0
  %1360 = vmatmul.mubr.f32.gmra.mrb[0].mxu0 %v1283
  %v1361 = vpop.f32.mrb[0].mxu0
  %v1362 = vadd.f32 1e-06, %v1361
  %v1363 = vpop.f32.mrb[0].mxu0
  %1364 = vmatprep.mubr.f32.mxu0 0.0
  %1365 = vmatmul.mubr.f32.gmra.mrb[0].mxu0 %v1284
  %v1366 = vpop.f32.mrb[0].mxu0
  %v1367 = vadd.f32 1e-06, %v1366
  %v1368 = vpop.f32.mrb[0].mxu0
  %1369 = vdwg.mxu0
  %v1370 = vrsqrt.pop %v1352
  %v1371 = vrsqrt.pop %v1357
  %v1372 = vrsqrt.pop %v1362
  %v1373 = vrsqrt.pop %v1367
  %v1374 = vmul.f32 %v1277, %v1370
  %v1375 = vmul.f32 %v1278, %v1371
  %v1376 = vmul.f32 %v1279, %v1372
  %v1377 = vmul.f32 %v1280, %v1373
  %v1378 = vld [vmem:[%s2 + $0x100] sm:$0xff]
  %v1379 = vld [vmem:[%s2 + $0x108] sm:$0xff]
  %v1380 = vld [vmem:[%s2 + $0x110] sm:$0xff]
  %v1381 = vld [vmem:[%s2 + $0x118] sm:$0xff]
  %v1382 = vld [vmem:[%s2 + $0x120] sm:$0xff]
  %v1383 = vld [vmem:[%s2 + $0x128] sm:$0xff]
  %v1384 = vld [vmem:[%s2 + $0x130] sm:$0xff]
  %v1385 = vld [vmem:[%s2 + $0x138] sm:$0xff]
  %v1386 = vld [vmem:[%s2 + $0x140] sm:$0xff]
  %v1387 = vld [vmem:[%s2 + $0x148] sm:$0xff]
  %v1388 = vld [vmem:[%s2 + $0x150] sm:$0xff]
  %v1389 = vld [vmem:[%s2 + $0x158] sm:$0xff]
  %v1390 = vld [vmem:[%s2 + $0x160] sm:$0xff]
  %v1391 = vld [vmem:[%s2 + $0x168] sm:$0xff]
  %v1392 = vld [vmem:[%s2 + $0x170] sm:$0xff]
  %v1393 = vld [vmem:[%s2 + $0x178] sm:$0xff]
  %v1394 = vld [vmem:[%s2 + $0x180] sm:$0xff]
  %v1395 = vld [vmem:[%s2 + $0x188] sm:$0xff]
  %v1396 = vld [vmem:[%s2 + $0x190] sm:$0xff]
  %v1397 = vld [vmem:[%s2 + $0x198] sm:$0xff]
  %v1398 = vld [vmem:[%s2 + $0x1a0] sm:$0xff]
  %v1399 = vld [vmem:[%s2 + $0x1a8] sm:$0xff]
  %v1400 = vld [vmem:[%s2 + $0x1b0] sm:$0xff]
  %v1401 = vld [vmem:[%s2 + $0x1b8] sm:$0xff]
  %v1402 = vld [vmem:[%s2 + $0x1c0] sm:$0xff]
  %v1403 = vld [vmem:[%s2 + $0x1c8] sm:$0xff]
  %v1404 = vld [vmem:[%s2 + $0x1d0] sm:$0xff]
  %v1405 = vld [vmem:[%s2 + $0x1d8] sm:$0xff]
  %v1406 = vld [vmem:[%s2 + $0x1e0] sm:$0xff]
  %v1407 = vld [vmem:[%s2 + $0x1e8] sm:$0xff]
  %v1408 = vld [vmem:[%s2 + $0x1f0] sm:$0xff]
  %v1409 = vld [vmem:[%s2 + $0x1f8] sm:$0xff]
  %s1410 = scalar_lea.vmem %s2, 659
  %v1411 = vld [vmem:[%s1410] ss:$8 sm:$0x3]
  %v1413 = vlaneseq
  %v1414 = vshrl.u32 %v1413, 7
  %v1415 = vsub.s32 0, %v1414
  %v1416 = vrot.slane %v1411, %v1415
  %v1417 = vlaneseq
  %v1418 = vshrl.u32 %v1417, 7
  %v1419 = vsub.s32 1, %v1418
  %v1420 = vrot.slane %v1411, %v1419
  %1423 = vmatprep.subr.mxu0 %v1379
  %1424 = vmatpush1.msra.mxu0 %v1378
  %1425 = vmatprep.subr.mxu0 %v1381
  %1426 = vmatpush1.msra.mxu0 %v1380
  %1427 = vmatprep.subr.mxu0 %v1383
  %1428 = vmatpush1.msra.mxu0 %v1382
  %1429 = vmatprep.subr.mxu0 %v1385
  %1430 = vmatpush1.msra.mxu0 %v1384
  %1431 = vmatprep.subr.mxu0 %v1387
  %1432 = vmatpush1.msra.mxu0 %v1386
  %1433 = vmatprep.subr.mxu0 %v1389
  %1434 = vmatpush1.msra.mxu0 %v1388
  %1435 = vmatprep.subr.mxu0 %v1391
  %1436 = vmatpush1.msra.mxu0 %v1390
  %1437 = vmatprep.subr.mxu0 %v1393
  %1438 = vmatpush1.msra.mxu0 %v1392
  %1439 = vmatprep.subr.mxu0 %v1395
  %1440 = vmatpush1.msra.mxu0 %v1394
  %1441 = vmatprep.subr.mxu0 %v1397
  %1442 = vmatpush1.msra.mxu0 %v1396
  %1443 = vmatprep.subr.mxu0 %v1399
  %1444 = vmatpush1.msra.mxu0 %v1398
  %1445 = vmatprep.subr.mxu0 %v1401
  %1446 = vmatpush1.msra.mxu0 %v1400
  %1447 = vmatprep.subr.mxu0 %v1403
  %1448 = vmatpush1.msra.mxu0 %v1402
  %1449 = vmatprep.subr.mxu0 %v1405
  %1450 = vmatpush1.msra.mxu0 %v1404
  %1451 = vmatprep.subr.mxu0 %v1407
  %1452 = vmatpush1.msra.mxu0 %v1406
  %1453 = vmatprep.subr.mxu0 %v1409
  %1454 = vmatpush1.msra.mxu0 %v1408
  %1455 = vmatprep.subr.mxu0 0.0
  %1456 = vmatpush1.msra.mxu0 0.0
  %1457 = vmatprep.subr.mxu0 0.0
  %1458 = vmatpush1.msra.mxu0 0.0
  %1459 = vmatprep.subr.mxu0 0.0
  %1460 = vmatpush1.msra.mxu0 0.0
  %1461 = vmatprep.subr.mxu0 0.0
  %1462 = vmatpush1.msra.mxu0 0.0
  %1463 = vmatprep.subr.mxu0 0.0
  %1464 = vmatpush1.msra.mxu0 0.0
  %1465 = vmatprep.subr.mxu0 0.0
  %1466 = vmatpush1.msra.mxu0 0.0
  %1467 = vmatprep.subr.mxu0 0.0
  %1468 = vmatpush1.msra.mxu0 0.0
  %1469 = vmatprep.subr.mxu0 0.0
  %1470 = vmatpush1.msra.mxu0 0.0
  %1471 = vmatprep.subr.mxu0 0.0
  %1472 = vmatpush1.msra.mxu0 0.0
  %1473 = vmatprep.subr.mxu0 0.0
  %1474 = vmatpush1.msra.mxu0 0.0
  %1475 = vmatprep.subr.mxu0 0.0
  %1476 = vmatpush1.msra.mxu0 0.0
  %1477 = vmatprep.subr.mxu0 0.0
  %1478 = vmatpush1.msra.mxu0 0.0
  %1479 = vmatprep.subr.mxu0 0.0
  %1480 = vmatpush1.msra.mxu0 0.0
  %1481 = vmatprep.subr.mxu0 0.0
  %1482 = vmatpush1.msra.mxu0 0.0
  %1483 = vmatprep.subr.mxu0 0.0
  %1484 = vmatpush1.msra.mxu0 0.0
  %1485 = vmatprep.subr.mxu0 0.0
  %1486 = vmatpush1.msra.mxu0 0.0
  %1487 = vmatprep.mubr.f32.mxu0 0.0
  %1488 = vmatmul.mubr.f32.gmra.mrb[0].mxu0 %v1374
  %v1489 = vpop.f32.mrb[0].mxu0
  %v1490 = vadd.f32 %v1416, %v1489
  %v1491 = vpop.f32.mrb[0].mxu0
  %v1492 = vadd.f32 %v1420, %v1491
  %1493 = vmatprep.mubr.f32.mxu0 0.0
  %1494 = vmatmul.mubr.f32.gmra.mrb[0].mxu0 %v1375
  %v1495 = vpop.f32.mrb[0].mxu0
  %v1496 = vadd.f32 %v1416, %v1495
  %v1497 = vpop.f32.mrb[0].mxu0
  %v1498 = vadd.f32 %v1420, %v1497
  %1499 = vmatprep.mubr.f32.mxu0 0.0
  %1500 = vmatmul.mubr.f32.gmra.mrb[0].mxu0 %v1376
  %v1501 = vpop.f32.mrb[0].mxu0
  %v1502 = vadd.f32 %v1416, %v1501
  %v1503 = vpop.f32.mrb[0].mxu0
  %v1504 = vadd.f32 %v1420, %v1503
  %1505 = vmatprep.mubr.f32.mxu0 0.0
  %1506 = vmatmul.mubr.f32.gmra.mrb[0].mxu0 %v1377
  %v1507 = vpop.f32.mrb[0].mxu0
  %v1508 = vadd.f32 %v1416, %v1507
  %v1509 = vpop.f32.mrb[0].mxu0
  %v1510 = vadd.f32 %v1420, %v1509
  %1511 = vdwg.mxu0
  %1516 = vrot.lane.b32.xlu0 %v1492, 64
  %v1517 = vpop.permute.xlu0 %1516
  %1518 = vrot.lane.b32.xlu0 %v1498, 64
  %v1519 = vpop.permute.xlu0 %1518
  %1520 = vrot.lane.b32.xlu0 %v1504, 64
  %v1521 = vpop.permute.xlu0 %1520
  %1522 = vrot.lane.b32.xlu0 %v1510, 64
  %v1523 = vpop.permute.xlu0 %1522
  %v1528 = vmul.f32 %v1490, %v1517
  %v1529 = vmul.f32 %v1496, %v1519
  %v1530 = vmul.f32 %v1502, %v1521
  %v1531 = vmul.f32 %v1508, %v1523
  %1536 = vrot.lane.b32.xlu0 %v1490, 64
  %v1537 = vpop.permute.xlu0 %1536
  %1538 = vrot.lane.b32.xlu0 %v1496, 64
  %v1539 = vpop.permute.xlu0 %1538
  %1540 = vrot.lane.b32.xlu0 %v1502, 64
  %v1541 = vpop.permute.xlu0 %1540
  %1542 = vrot.lane.b32.xlu0 %v1508, 64
  %v1543 = vpop.permute.xlu0 %1542
  %v1548 = vmul.f32 %v1492, %v1537
  %v1549 = vmul.f32 %v1498, %v1539
  %v1550 = vmul.f32 %v1504, %v1541
  %v1551 = vmul.f32 %v1510, %v1543
  %1556 = vrot.lane.b32.xlu0 %v1548, 64
  %v1557 = vpop.permute.xlu0 %1556
  %1558 = vrot.lane.b32.xlu0 %v1549, 64
  %v1559 = vpop.permute.xlu0 %1558
  %1560 = vrot.lane.b32.xlu0 %v1550, 64
  %v1561 = vpop.permute.xlu0 %1560
  %1562 = vrot.lane.b32.xlu0 %v1551, 64
  %v1563 = vpop.permute.xlu0 %1562
  %v1568 = vsel %vm856, %v1528, %v1557
  %v1569 = vsel %vm856, %v1529, %v1559
  %v1570 = vsel %vm856, %v1530, %v1561
  %v1571 = vsel %vm856, %v1531, %v1563
  %v1572 = vld [vmem:[%s1 + $0x100] sm:$0xff]
  %v1573 = vld [vmem:[%s1 + $0x108] sm:$0xff]
  %v1574 = vld [vmem:[%s1 + $0x110] sm:$0xff]
  %v1575 = vld [vmem:[%s1 + $0x118] sm:$0xff]
  %v1576 = vld [vmem:[%s1 + $0x120] sm:$0xff]
  %v1577 = vld [vmem:[%s1 + $0x128] sm:$0xff]
  %v1578 = vld [vmem:[%s1 + $0x130] sm:$0xff]
  %v1579 = vld [vmem:[%s1 + $0x138] sm:$0xff]
  %v1580 = vld [vmem:[%s1 + $0x140] sm:$0xff]
  %v1581 = vld [vmem:[%s1 + $0x148] sm:$0xff]
  %v1582 = vld [vmem:[%s1 + $0x150] sm:$0xff]
  %v1583 = vld [vmem:[%s1 + $0x158] sm:$0xff]
  %v1584 = vld [vmem:[%s1 + $0x160] sm:$0xff]
  %v1585 = vld [vmem:[%s1 + $0x168] sm:$0xff]
  %v1586 = vld [vmem:[%s1 + $0x170] sm:$0xff]
  %v1587 = vld [vmem:[%s1 + $0x178] sm:$0xff]
  %v1588 = vld [vmem:[%s1 + $0x221] sm:$0x1]
  %v1589 = vlaneseq
  %v1590 = vshrl.u32 %v1589, 7
  %v1591 = vsub.s32 0, %v1590
  %v1592 = vrot.slane %v1588, %v1591
  %1593 = vmatprep.subr.mxu0 0.0
  %1594 = vmatpush1.msra.mxu0 %v1572
  %1595 = vmatprep.subr.mxu0 0.0
  %1596 = vmatpush1.msra.mxu0 %v1573
  %1597 = vmatprep.subr.mxu0 0.0
  %1598 = vmatpush1.msra.mxu0 %v1574
  %1599 = vmatprep.subr.mxu0 0.0
  %1600 = vmatpush1.msra.mxu0 %v1575
  %1601 = vmatprep.subr.mxu0 0.0
  %1602 = vmatpush1.msra.mxu0 %v1576
  %1603 = vmatprep.subr.mxu0 0.0
  %1604 = vmatpush1.msra.mxu0 %v1577
  %1605 = vmatprep.subr.mxu0 0.0
  %1606 = vmatpush1.msra.mxu0 %v1578
  %1607 = vmatprep.subr.mxu0 0.0
  %1608 = vmatpush1.msra.mxu0 %v1579
  %1609 = vmatprep.subr.mxu0 0.0
  %1610 = vmatpush1.msra.mxu0 %v1580
  %1611 = vmatprep.subr.mxu0 0.0
  %1612 = vmatpush1.msra.mxu0 %v1581
  %1613 = vmatprep.subr.mxu0 0.0
  %1614 = vmatpush1.msra.mxu0 %v1582
  %1615 = vmatprep.subr.mxu0 0.0
  %1616 = vmatpush1.msra.mxu0 %v1583
  %1617 = vmatprep.subr.mxu0 0.0
  %1618 = vmatpush1.msra.mxu0 %v1584
  %1619 = vmatprep.subr.mxu0 0.0
  %1620 = vmatpush1.msra.mxu0 %v1585
  %1621 = vmatprep.subr.mxu0 0.0
  %1622 = vmatpush1.msra.mxu0 %v1586
  %1623 = vmatprep.subr.mxu0 0.0
  %1624 = vmatpush1.msra.mxu0 %v1587
  %1625 = vmatprep.subr.mxu0 0.0
  %1626 = vmatpush1.msra.mxu0 0.0
  %1627 = vmatprep.subr.mxu0 0.0
  %1628 = vmatpush1.msra.mxu0 0.0
  %1629 = vmatprep.subr.mxu0 0.0
  %1630 = vmatpush1.msra.mxu0 0.0
  %1631 = vmatprep.subr.mxu0 0.0
  %1632 = vmatpush1.msra.mxu0 0.0
  %1633 = vmatprep.subr.mxu0 0.0
  %1634 = vmatpush1.msra.mxu0 0.0
  %1635 = vmatprep.subr.mxu0 0.0
  %1636 = vmatpush1.msra.mxu0 0.0
  %1637 = vmatprep.subr.mxu0 0.0
  %1638 = vmatpush1.msra.mxu0 0.0
  %1639 = vmatprep.subr.mxu0 0.0
  %1640 = vmatpush1.msra.mxu0 0.0
  %1641 = vmatprep.subr.mxu0 0.0
  %1642 = vmatpush1.msra.mxu0 0.0
  %1643 = vmatprep.subr.mxu0 0.0
  %1644 = vmatpush1.msra.mxu0 0.0
  %1645 = vmatprep.subr.mxu0 0.0
  %1646 = vmatpush1.msra.mxu0 0.0
  %1647 = vmatprep.subr.mxu0 0.0
  %1648 = vmatpush1.msra.mxu0 0.0
  %1649 = vmatprep.subr.mxu0 0.0
  %1650 = vmatpush1.msra.mxu0 0.0
  %1651 = vmatprep.subr.mxu0 0.0
  %1652 = vmatpush1.msra.mxu0 0.0
  %1653 = vmatprep.subr.mxu0 0.0
  %1654 = vmatpush1.msra.mxu0 0.0
  %1655 = vmatprep.subr.mxu0 0.0
  %1656 = vmatpush1.msra.mxu0 0.0
  %1657 = vmatprep.mubr.f32.mxu0 0.0
  %1658 = vmatmul.mubr.f32.gmra.mrb[0].mxu0 %v1568
  %v1659 = vpop.f32.mrb[0].mxu0
  %v1660 = vadd.f32 %v1592, %v1659
  %v1661 = vpop.f32.mrb[0].mxu0
  %1662 = vmatprep.mubr.f32.mxu0 0.0
  %1663 = vmatmul.mubr.f32.gmra.mrb[0].mxu0 %v1569
  %v1664 = vpop.f32.mrb[0].mxu0
  %v1665 = vadd.f32 %v1592, %v1664
  %v1666 = vpop.f32.mrb[0].mxu0
  %1667 = vmatprep.mubr.f32.mxu0 0.0
  %1668 = vmatmul.mubr.f32.gmra.mrb[0].mxu0 %v1570
  %v1669 = vpop.f32.mrb[0].mxu0
  %v1670 = vadd.f32 %v1592, %v1669
  %v1671 = vpop.f32.mrb[0].mxu0
  %1672 = vmatprep.mubr.f32.mxu0 0.0
  %1673 = vmatmul.mubr.f32.gmra.mrb[0].mxu0 %v1571
  %v1674 = vpop.f32.mrb[0].mxu0
  %v1675 = vadd.f32 %v1592, %v1674
  %v1676 = vpop.f32.mrb[0].mxu0
  %1677 = vdwg.mxu0
  %v1678 = vld [vmem:[%s1 + $0x224] sm:$0x1]
  %v1679 = vlaneseq
  %v1680 = vshrl.u32 %v1679, 7
  %v1681 = vsub.s32 0, %v1680
  %v1682 = vrot.slane %v1678, %v1681
  %v1683 = vmul.f32 %v1660, %v1682
  %v1684 = vmul.f32 %v1665, %v1682
  %v1685 = vmul.f32 %v1670, %v1682
  %v1686 = vmul.f32 %v1675, %v1682
  %v1687 = vadd.f32 %v1188, %v1683
  %v1688 = vadd.f32 %v1189, %v1684
  %v1689 = vadd.f32 %v1190, %v1685
  %v1690 = vadd.f32 %v1191, %v1686
  %1691 = vst [vmem:[%s3] sm:$0xff] %v1687
  %1692 = vst [vmem:[%s3 + $0x8] sm:$0xff] %v1688
  %1693 = vst [vmem:[%s3 + $0x10] sm:$0xff] %v1689
  %1694 = vst [vmem:[%s3 + $0x18] sm:$0xff] %v1690
  // Predicated region
  $region14: #{fwd.1} parent=0 // pred_check
    _
  $region15: #{fwd.1} parent=0 // pred_check_branch
    %1696 = sbr.rel (0) target = $region17
  $region16: #{fwd.1} parent=0 // pred_region
    _
  $region17: #{fwd.1} parent=0 // pred_fallthru
    _
  // Predicated region
  $region18: #{fwd.1} parent=0 // pred_check
    _
  $region19: #{fwd.1} parent=0 // pred_check_branch
    %1698 = sbr.rel (0) target = $region21
  $region20: #{fwd.1} parent=0 // pred_region
    _
  $region21: #{fwd.1} parent=0 // pred_fallthru
    _

</llo_original>
